<compile_context>
chip_gen: v6e
topology: v6e:2x2x1
jax: 0.10.0
libtpu: 0.0.40
codegen_flags: <defaults>
</compile_context>

<pallas_src>
import functools
import math

import jax
import jax.numpy as jnp
from jax import lax
from jax.experimental import pallas as pl
from jax.experimental.pallas import tpu as pltpu

LN_EPS = 1e-5  # PyTorch nn.LayerNorm default


def _gelu_exact(x):
    # PyTorch nn.GELU() default = exact (erf-based) GELU.
    return 0.5 * x * (1.0 + lax.erf(x * (1.0 / math.sqrt(2.0))))


def _layernorm(x, gamma, beta):
    mu = jnp.mean(x, axis=-1, keepdims=True)
    var = jnp.mean((x - mu) ** 2, axis=-1, keepdims=True)
    return (x - mu) * lax.rsqrt(var + LN_EPS) * gamma + beta


def encoder_block_kernel(
    x_ref,       # (b_step, N, C) f32
    ln1_g_ref,   # (1, C) f32
    ln1_b_ref,   # (1, C) f32
    wqkv_ref,    # (C, 3C)  matmul_dtype
    wo_ref,      # (C, C)   matmul_dtype
    bo_ref,      # (1, C)   f32
    ln2_g_ref,   # (1, C)   f32
    ln2_b_ref,   # (1, C)   f32
    w1_ref,      # (C, H)   matmul_dtype
    b1_ref,      # (1, H)   f32
    w2_ref,      # (H, C)   matmul_dtype
    b2_ref,      # (1, C)   f32
    o_ref,       # (b_step, N, C) f32
    *, heads, scale, matmul_dtype,
):
    bs, N, C = x_ref.shape
    Ms = bs * N
    hd = C // heads

    # Collapse batch into the matmul M dimension (leading-dim-only reshape,
    # lane dim C untouched -> free).
    x = x_ref[...].reshape(Ms, C)

    # ---- LayerNorm 1 (f32) ----
    x1 = _layernorm(x, ln1_g_ref[0], ln1_b_ref[0])

    # ---- QKV projection: one (Ms, C) @ (C, 3C) MXU pass for all heads ----
    qkv = jnp.dot(x1.astype(matmul_dtype), wqkv_ref[...],
                  preferred_element_type=jnp.float32)        # (Ms, 3C) f32

    # TransGAN scales by 1/sqrt(dim); apply it to q (Ms*C elems), not scores.
    q = qkv[:, 0 * C:1 * C] * scale
    k = qkv[:, 1 * C:2 * C]
    v = qkv[:, 2 * C:3 * C]
    q3 = q.reshape(bs, N, C)
    k3 = k.reshape(bs, N, C)
    v3 = v.reshape(bs, N, C)

    # ---- attention: per-head, batched over the batch dim ----
    # Each head's output is folded straight into the output projection, so
    # every store / accumulate stays 128-lane dense (C wide) and there is no
    # (Ms, C) scratch or per-head masked store.
    attn_out = jnp.zeros((Ms, C), jnp.float32)
    for h in range(heads):
        lo = h * hd
        qh = q3[:, :, lo:lo + hd].astype(matmul_dtype)        # (bs, N, hd)
        kh = k3[:, :, lo:lo + hd].astype(matmul_dtype)        # (bs, N, hd)
        vh = v3[:, :, lo:lo + hd].astype(matmul_dtype)        # (bs, N, hd)
        s = jnp.einsum("bqd,bkd->bqk", qh, kh,
                       preferred_element_type=jnp.float32)    # (bs, N, N) f32
        s_max = jnp.max(s, axis=-1, keepdims=True)
        p = jnp.exp(s - s_max)
        p = p * pl.reciprocal(jnp.sum(p, axis=-1, keepdims=True), approx=True)
        oh = jnp.einsum("bqk,bkd->bqd", p.astype(matmul_dtype), vh,
                        preferred_element_type=jnp.float32)   # (bs, N, hd)
        attn_out = attn_out + jnp.dot(
            oh.reshape(Ms, hd).astype(matmul_dtype),
            wo_ref[lo:lo + hd, :],
            preferred_element_type=jnp.float32)               # (Ms, C)

    # ---- output projection bias + residual 1 ----
    x = x + attn_out + bo_ref[0]

    # ---- LayerNorm 2 + MLP + residual 2 ----
    x2 = _layernorm(x, ln2_g_ref[0], ln2_b_ref[0])
    h1 = jnp.dot(x2.astype(matmul_dtype), w1_ref[...],
                 preferred_element_type=jnp.float32) + b1_ref[0]
    h1 = _gelu_exact(h1)
    mlp = jnp.dot(h1.astype(matmul_dtype), w2_ref[...],
                  preferred_element_type=jnp.float32) + b2_ref[0]

    # Single lane-dense store of the whole per-step output tile.
    o_ref[...] = (x + mlp).reshape(bs, N, C)


def _vmem_limit_bytes(b_step, N, C, H, matmul_dtype):
    f32 = 4
    wb = jnp.dtype(matmul_dtype).itemsize
    Ms = b_step * N
    weights = (C * 3 * C + C * C + C * H + H * C) * wb + (3 * C + H + 4 * C) * f32
    io = 2 * 2 * Ms * C * f32                       # double-buffered x / out tiles
    inter = (Ms * 3 * C + 3 * Ms * C + 2 * b_step * N * N
             + 2 * Ms * C + Ms * H + 4 * Ms * C) * f32
    est = weights + io + inter
    return int(min(max(2 * est, 32 * 1024 * 1024), 64 * 1024 * 1024))


def encoder_block(x, params, *, heads, matmul_dtype=jnp.float32, batch_step=1):
    B, N, C = x.shape
    H = params["w1"].shape[1]
    assert B % batch_step == 0
    scale = 1.0 / (C ** 0.5)   # TransGAN: 1/sqrt(dim), NOT 1/sqrt(head_dim)

    weights = [
        params["ln1_g"], params["ln1_b"],
        params["wqkv"].astype(matmul_dtype),
        params["wo"].astype(matmul_dtype), params["bo"],
        params["ln2_g"], params["ln2_b"],
        params["w1"].astype(matmul_dtype), params["b1"],
        params["w2"].astype(matmul_dtype), params["b2"],
    ]

    def const_spec(arr):
        # Constant block index across grid steps -> Pallas keeps the operand
        # resident in VMEM (DMA'd exactly once).
        return pl.BlockSpec(arr.shape, lambda b: (0, 0))

    kernel = functools.partial(
        encoder_block_kernel,
        heads=heads, scale=scale, matmul_dtype=matmul_dtype,
    )

    out = pl.pallas_call(
        kernel,
        out_shape=jax.ShapeDtypeStruct((B, N, C), jnp.float32),
        grid=(B // batch_step,),
        in_specs=[pl.BlockSpec((batch_step, N, C), lambda b: (b, 0, 0))]
                + [const_spec(w) for w in weights],
        out_specs=pl.BlockSpec((batch_step, N, C), lambda b: (b, 0, 0)),
        compiler_params=pltpu.CompilerParams(
            dimension_semantics=("parallel",),
            vmem_limit_bytes=_vmem_limit_bytes(batch_step, N, C, H, matmul_dtype),
        ),
    )(x, *weights)

    return out


# ---------------- pure-JAX reference (mirrors the PyTorch forward) ------------
def encoder_block_ref(x, params, *, heads):
    B, N, C = x.shape
    hd = C // heads
    scale = 1.0 / (C ** 0.5)

    def ln(v, g, b):
        mu = jnp.mean(v, axis=-1, keepdims=True)
        var = jnp.mean((v - mu) ** 2, axis=-1, keepdims=True)
        return (v - mu) / jnp.sqrt(var + LN_EPS) * g + b

    x1 = ln(x, params["ln1_g"][0], params["ln1_b"][0])
    qkv = x1 @ params["wqkv"]                                  # (B, N, 3C)
    qkv = qkv.reshape(B, N, 3, heads, hd)
    q, k, v = jnp.transpose(qkv, (2, 0, 3, 1, 4))              # each (B, H, N, hd)
    dot = jnp.einsum("bhqd,bhkd->bhqk", q, k) * scale
    attn = jax.nn.softmax(dot, axis=-1)
    o = jnp.einsum("bhqk,bhkd->bhqd", attn, v)
    o = jnp.transpose(o, (0, 2, 1, 3)).reshape(B, N, C)
    o = o @ params["wo"] + params["bo"][0]
    x = x + o

    x2 = ln(x, params["ln2_g"][0], params["ln2_b"][0])
    h1 = _gelu_exact(x2 @ params["w1"] + params["b1"][0])
    mlp = h1 @ params["w2"] + params["b2"][0]
    return x + mlp


if __name__ == "__main__":
    # Small shapes consistent with the module: B=2, N=8 tokens, dim=32, heads=4,
    # mlp hidden = dim * 4 = 128.
    B, N, C, HEADS, MLP_RATIO = 2, 8, 32, 4, 4
    H = C * MLP_RATIO

    key = jax.random.PRNGKey(0)
    ks = jax.random.split(key, 8)

    params = {
        "ln1_g": jnp.ones((1, C), jnp.float32),
        "ln1_b": jnp.zeros((1, C), jnp.float32),
        "wqkv": 0.02 * jax.random.normal(ks[0], (C, 3 * C), jnp.float32),
        "wo":   0.02 * jax.random.normal(ks[1], (C, C), jnp.float32),
        "bo":   0.01 * jax.random.normal(ks[2], (1, C), jnp.float32),
        "ln2_g": jnp.ones((1, C), jnp.float32),
        "ln2_b": jnp.zeros((1, C), jnp.float32),
        "w1":   0.02 * jax.random.normal(ks[3], (C, H), jnp.float32),
        "b1":   0.01 * jax.random.normal(ks[4], (1, H), jnp.float32),
        "w2":   0.02 * jax.random.normal(ks[5], (H, C), jnp.float32),
        "b2":   0.01 * jax.random.normal(ks[6], (1, C), jnp.float32),
    }

    x = jax.random.normal(ks[7], (B, N, C), jnp.float32)
    ref = encoder_block_ref(x, params, heads=HEADS)

    # f32 matmul path: tight check against the f32 reference (tolerance covers
    # the EUP approximate reciprocal in the softmax denominator, << 1e-3).
    out = jax.block_until_ready(encoder_block(x, params, heads=HEADS))
    assert out.shape == (B, N, C)
    assert jnp.allclose(out, ref, rtol=1e-3, atol=1e-3), (
        f"f32 path: max abs diff = {jnp.max(jnp.abs(out - ref))}"
    )

    # bf16 matmul path (the v6e/v7x production template): loose check.
    out_bf16 = jax.block_until_ready(
        encoder_block(x, params, heads=HEADS, matmul_dtype=jnp.bfloat16)
    )
    assert out_bf16.shape == (B, N, C)
    assert jnp.allclose(out_bf16, ref, rtol=5e-2, atol=5e-2), (
        f"bf16 path: max abs diff = {jnp.max(jnp.abs(out_bf16 - ref))}"
    )

    print("KERNEL_OK")
</pallas_src>

<mosaic_0001>
module attributes {stable_mosaic.version = 11 : i64} {
  func.func @encoder_block_kernel(%arg0: i32, %arg1: memref<1x8x32xf32, #tpu.memory_space<vmem>>, %arg2: memref<1x32xf32, #tpu.memory_space<vmem>>, %arg3: memref<1x32xf32, #tpu.memory_space<vmem>>, %arg4: memref<32x96xf32, #tpu.memory_space<vmem>>, %arg5: memref<32x32xf32, #tpu.memory_space<vmem>>, %arg6: memref<1x32xf32, #tpu.memory_space<vmem>>, %arg7: memref<1x32xf32, #tpu.memory_space<vmem>>, %arg8: memref<1x32xf32, #tpu.memory_space<vmem>>, %arg9: memref<32x128xf32, #tpu.memory_space<vmem>>, %arg10: memref<1x128xf32, #tpu.memory_space<vmem>>, %arg11: memref<128x32xf32, #tpu.memory_space<vmem>>, %arg12: memref<1x32xf32, #tpu.memory_space<vmem>>, %arg13: memref<1x8x32xf32, #tpu.memory_space<vmem>>) attributes {dimension_semantics = [#tpu.dimension_semantics<parallel>], iteration_bounds = array<i64: 2>, scalar_prefetch = 0 : i64, scratch_operands = 0 : i64, tpu.core_type = #tpu.core_type<tc>, window_params = [{transform_indices = @transform_0, window_bounds = array<i64: 1, 8, 32>}, {pipeline_mode = #tpu.pipeline_mode<synchronous>, transform_indices = @transform_1, window_bounds = array<i64: 1, 32>}, {pipeline_mode = #tpu.pipeline_mode<synchronous>, transform_indices = @transform_2, window_bounds = array<i64: 1, 32>}, {pipeline_mode = #tpu.pipeline_mode<synchronous>, transform_indices = @transform_3, window_bounds = array<i64: 32, 96>}, {pipeline_mode = #tpu.pipeline_mode<synchronous>, transform_indices = @transform_4, window_bounds = array<i64: 32, 32>}, {pipeline_mode = #tpu.pipeline_mode<synchronous>, transform_indices = @transform_5, window_bounds = array<i64: 1, 32>}, {pipeline_mode = #tpu.pipeline_mode<synchronous>, transform_indices = @transform_6, window_bounds = array<i64: 1, 32>}, {pipeline_mode = #tpu.pipeline_mode<synchronous>, transform_indices = @transform_7, window_bounds = array<i64: 1, 32>}, {pipeline_mode = #tpu.pipeline_mode<synchronous>, transform_indices = @transform_8, window_bounds = array<i64: 32, 128>}, {pipeline_mode = #tpu.pipeline_mode<synchronous>, transform_indices = @transform_9, window_bounds = array<i64: 1, 128>}, {pipeline_mode = #tpu.pipeline_mode<synchronous>, transform_indices = @transform_10, window_bounds = array<i64: 128, 32>}, {pipeline_mode = #tpu.pipeline_mode<synchronous>, transform_indices = @transform_11, window_bounds = array<i64: 1, 32>}, {transform_indices = @transform_12, window_bounds = array<i64: 1, 8, 32>}]} {
    %c0 = arith.constant 0 : index
    %c0_0 = arith.constant 0 : index
    %c0_1 = arith.constant 0 : index
    %0 = vector.load %arg1[%c0, %c0_0, %c0_1] : memref<1x8x32xf32, #tpu.memory_space<vmem>>, vector<1x8x32xf32>
    %1 = vector.shape_cast %0 : vector<1x8x32xf32> to vector<8x32xf32>
    %c0_2 = arith.constant 0 : index
    %c0_3 = arith.constant 0 : index
    %2 = vector.load %arg2[%c0_2, %c0_3] : memref<1x32xf32, #tpu.memory_space<vmem>>, vector<1x32xf32>
    %3 = vector.shape_cast %2 : vector<1x32xf32> to vector<32xf32>
    %c0_4 = arith.constant 0 : index
    %c0_5 = arith.constant 0 : index
    %4 = vector.load %arg3[%c0_4, %c0_5] : memref<1x32xf32, #tpu.memory_space<vmem>>, vector<1x32xf32>
    %5 = vector.shape_cast %4 : vector<1x32xf32> to vector<32xf32>
    %cst = arith.constant dense<0.000000e+00> : vector<8xf32>
    %6 = vector.multi_reduction <add>, %1, %cst [1] : vector<8x32xf32> to vector<8xf32>
    %7 = vector.shape_cast %6 : vector<8xf32> to vector<8x1xf32>
    %cst_6 = arith.constant 3.200000e+01 : f32
    %8 = vector.broadcast %cst_6 : f32 to vector<8x1xf32>
    %9 = arith.divf %7, %8 : vector<8x1xf32>
    %10 = vector.broadcast %9 : vector<8x1xf32> to vector<8x32xf32>
    %11 = arith.subf %1, %10 : vector<8x32xf32>
    %12 = arith.mulf %11, %11 : vector<8x32xf32>
    %cst_7 = arith.constant dense<0.000000e+00> : vector<8xf32>
    %13 = vector.multi_reduction <add>, %12, %cst_7 [1] : vector<8x32xf32> to vector<8xf32>
    %14 = vector.shape_cast %13 : vector<8xf32> to vector<8x1xf32>
    %cst_8 = arith.constant 3.200000e+01 : f32
    %15 = vector.broadcast %cst_8 : f32 to vector<8x1xf32>
    %16 = arith.divf %14, %15 : vector<8x1xf32>
    %17 = vector.broadcast %9 : vector<8x1xf32> to vector<8x32xf32>
    %18 = arith.subf %1, %17 : vector<8x32xf32>
    %cst_9 = arith.constant 9.99999974E-6 : f32
    %19 = vector.broadcast %cst_9 : f32 to vector<8x1xf32>
    %20 = arith.addf %16, %19 : vector<8x1xf32>
    %21 = math.rsqrt %20 : vector<8x1xf32>
    %22 = vector.broadcast %21 : vector<8x1xf32> to vector<8x32xf32>
    %23 = arith.mulf %18, %22 : vector<8x32xf32>
    %24 = vector.shape_cast %3 : vector<32xf32> to vector<1x32xf32>
    %25 = vector.broadcast %24 : vector<1x32xf32> to vector<8x32xf32>
    %26 = arith.mulf %23, %25 : vector<8x32xf32>
    %27 = vector.shape_cast %5 : vector<32xf32> to vector<1x32xf32>
    %28 = vector.broadcast %27 : vector<1x32xf32> to vector<8x32xf32>
    %29 = arith.addf %26, %28 : vector<8x32xf32>
    %c0_10 = arith.constant 0 : index
    %c0_11 = arith.constant 0 : index
    %30 = vector.load %arg4[%c0_10, %c0_11] : memref<32x96xf32, #tpu.memory_space<vmem>>, vector<32x96xf32>
    %cst_12 = arith.constant dense<0.000000e+00> : vector<8x96xf32>
    %31 = tpu.matmul %29, %30, %cst_12 {dimension_numbers = #tpu.dot_dimension_numbers<[1], [0], [0], [1], [0, 0, 1, 1], [], []>} : vector<8x32xf32>, vector<32x96xf32>, vector<8x96xf32> -> vector<8x96xf32>
    %32 = vector.extract_strided_slice %31 {offsets = [0, 0], sizes = [8, 32], strides = [1, 1]} : vector<8x96xf32> to vector<8x32xf32>
    %cst_13 = arith.constant 0.176776692 : f32
    %33 = vector.broadcast %cst_13 : f32 to vector<8x32xf32>
    %34 = arith.mulf %32, %33 : vector<8x32xf32>
    %35 = vector.extract_strided_slice %31 {offsets = [0, 32], sizes = [8, 32], strides = [1, 1]} : vector<8x96xf32> to vector<8x32xf32>
    %36 = vector.extract_strided_slice %31 {offsets = [0, 64], sizes = [8, 32], strides = [1, 1]} : vector<8x96xf32> to vector<8x32xf32>
    %37 = vector.shape_cast %34 : vector<8x32xf32> to vector<1x8x32xf32>
    %38 = vector.shape_cast %35 : vector<8x32xf32> to vector<1x8x32xf32>
    %39 = vector.shape_cast %36 : vector<8x32xf32> to vector<1x8x32xf32>
    %cst_14 = arith.constant 0.000000e+00 : f32
    %40 = vector.broadcast %cst_14 : f32 to vector<8x32xf32>
    %41 = vector.extract_strided_slice %37 {offsets = [0, 0, 0], sizes = [1, 8, 8], strides = [1, 1, 1]} : vector<1x8x32xf32> to vector<1x8x8xf32>
    %42 = vector.extract_strided_slice %38 {offsets = [0, 0, 0], sizes = [1, 8, 8], strides = [1, 1, 1]} : vector<1x8x32xf32> to vector<1x8x8xf32>
    %43 = vector.extract_strided_slice %39 {offsets = [0, 0, 0], sizes = [1, 8, 8], strides = [1, 1, 1]} : vector<1x8x32xf32> to vector<1x8x8xf32>
    "tpu.trace_start"() <{level = 10 : i32, message = "bqd,bkd->bqk"}> : () -> ()
    %cst_15 = arith.constant dense<0.000000e+00> : vector<1x8x8xf32>
    %44 = tpu.matmul %41, %42, %cst_15 {dimension_numbers = #tpu.dot_dimension_numbers<[2], [2], [1], [1], [0, 0, 0, 1, 1, 1], [0], [0]>} : vector<1x8x8xf32>, vector<1x8x8xf32>, vector<1x8x8xf32> -> vector<1x8x8xf32>
    "tpu.trace_stop"() : () -> ()
    %cst_16 = arith.constant dense<0xFF800000> : vector<1x8xf32>
    %45 = vector.multi_reduction <maximumf>, %44, %cst_16 [2] : vector<1x8x8xf32> to vector<1x8xf32>
    %46 = vector.shape_cast %45 : vector<1x8xf32> to vector<1x8x1xf32>
    %47 = vector.broadcast %46 : vector<1x8x1xf32> to vector<1x8x8xf32>
    %48 = arith.subf %44, %47 : vector<1x8x8xf32>
    %49 = math.exp %48 : vector<1x8x8xf32>
    %cst_17 = arith.constant dense<0.000000e+00> : vector<1x8xf32>
    %50 = vector.multi_reduction <add>, %49, %cst_17 [2] : vector<1x8x8xf32> to vector<1x8xf32>
    %51 = vector.shape_cast %50 : vector<1x8xf32> to vector<1x8x1xf32>
    %52 = tpu.reciprocal %51 {approx = true} : vector<1x8x1xf32> -> vector<1x8x1xf32>
    %53 = vector.broadcast %52 : vector<1x8x1xf32> to vector<1x8x8xf32>
    %54 = arith.mulf %49, %53 : vector<1x8x8xf32>
    "tpu.trace_start"() <{level = 10 : i32, message = "bqk,bkd->bqd"}> : () -> ()
    %cst_18 = arith.constant dense<0.000000e+00> : vector<1x8x8xf32>
    %55 = tpu.matmul %54, %43, %cst_18 {dimension_numbers = #tpu.dot_dimension_numbers<[2], [1], [1], [2], [0, 0, 0, 1, 1, 2], [0], [0]>} : vector<1x8x8xf32>, vector<1x8x8xf32>, vector<1x8x8xf32> -> vector<1x8x8xf32>
    "tpu.trace_stop"() : () -> ()
    %56 = vector.shape_cast %55 : vector<1x8x8xf32> to vector<8x8xf32>
    %c0_19 = arith.constant 0 : index
    %c0_20 = arith.constant 0 : index
    %57 = vector.load %arg5[%c0_19, %c0_20] : memref<32x32xf32, #tpu.memory_space<vmem>>, vector<8x32xf32>
    %cst_21 = arith.constant dense<0.000000e+00> : vector<8x32xf32>
    %58 = tpu.matmul %56, %57, %cst_21 {dimension_numbers = #tpu.dot_dimension_numbers<[1], [0], [0], [1], [0, 0, 1, 1], [], []>} : vector<8x8xf32>, vector<8x32xf32>, vector<8x32xf32> -> vector<8x32xf32>
    %59 = arith.addf %40, %58 : vector<8x32xf32>
    %60 = vector.extract_strided_slice %37 {offsets = [0, 0, 8], sizes = [1, 8, 8], strides = [1, 1, 1]} : vector<1x8x32xf32> to vector<1x8x8xf32>
    %61 = vector.extract_strided_slice %38 {offsets = [0, 0, 8], sizes = [1, 8, 8], strides = [1, 1, 1]} : vector<1x8x32xf32> to vector<1x8x8xf32>
    %62 = vector.extract_strided_slice %39 {offsets = [0, 0, 8], sizes = [1, 8, 8], strides = [1, 1, 1]} : vector<1x8x32xf32> to vector<1x8x8xf32>
    "tpu.trace_start"() <{level = 10 : i32, message = "bqd,bkd->bqk"}> : () -> ()
    %cst_22 = arith.constant dense<0.000000e+00> : vector<1x8x8xf32>
    %63 = tpu.matmul %60, %61, %cst_22 {dimension_numbers = #tpu.dot_dimension_numbers<[2], [2], [1], [1], [0, 0, 0, 1, 1, 1], [0], [0]>} : vector<1x8x8xf32>, vector<1x8x8xf32>, vector<1x8x8xf32> -> vector<1x8x8xf32>
    "tpu.trace_stop"() : () -> ()
    %cst_23 = arith.constant dense<0xFF800000> : vector<1x8xf32>
    %64 = vector.multi_reduction <maximumf>, %63, %cst_23 [2] : vector<1x8x8xf32> to vector<1x8xf32>
    %65 = vector.shape_cast %64 : vector<1x8xf32> to vector<1x8x1xf32>
    %66 = vector.broadcast %65 : vector<1x8x1xf32> to vector<1x8x8xf32>
    %67 = arith.subf %63, %66 : vector<1x8x8xf32>
    %68 = math.exp %67 : vector<1x8x8xf32>
    %cst_24 = arith.constant dense<0.000000e+00> : vector<1x8xf32>
    %69 = vector.multi_reduction <add>, %68, %cst_24 [2] : vector<1x8x8xf32> to vector<1x8xf32>
    %70 = vector.shape_cast %69 : vector<1x8xf32> to vector<1x8x1xf32>
    %71 = tpu.reciprocal %70 {approx = true} : vector<1x8x1xf32> -> vector<1x8x1xf32>
    %72 = vector.broadcast %71 : vector<1x8x1xf32> to vector<1x8x8xf32>
    %73 = arith.mulf %68, %72 : vector<1x8x8xf32>
    "tpu.trace_start"() <{level = 10 : i32, message = "bqk,bkd->bqd"}> : () -> ()
    %cst_25 = arith.constant dense<0.000000e+00> : vector<1x8x8xf32>
    %74 = tpu.matmul %73, %62, %cst_25 {dimension_numbers = #tpu.dot_dimension_numbers<[2], [1], [1], [2], [0, 0, 0, 1, 1, 2], [0], [0]>} : vector<1x8x8xf32>, vector<1x8x8xf32>, vector<1x8x8xf32> -> vector<1x8x8xf32>
    "tpu.trace_stop"() : () -> ()
    %75 = vector.shape_cast %74 : vector<1x8x8xf32> to vector<8x8xf32>
    %c8 = arith.constant 8 : index
    %c0_26 = arith.constant 0 : index
    %76 = vector.load %arg5[%c8, %c0_26] : memref<32x32xf32, #tpu.memory_space<vmem>>, vector<8x32xf32>
    %cst_27 = arith.constant dense<0.000000e+00> : vector<8x32xf32>
    %77 = tpu.matmul %75, %76, %cst_27 {dimension_numbers = #tpu.dot_dimension_numbers<[1], [0], [0], [1], [0, 0, 1, 1], [], []>} : vector<8x8xf32>, vector<8x32xf32>, vector<8x32xf32> -> vector<8x32xf32>
    %78 = arith.addf %59, %77 : vector<8x32xf32>
    %79 = vector.extract_strided_slice %37 {offsets = [0, 0, 16], sizes = [1, 8, 8], strides = [1, 1, 1]} : vector<1x8x32xf32> to vector<1x8x8xf32>
    %80 = vector.extract_strided_slice %38 {offsets = [0, 0, 16], sizes = [1, 8, 8], strides = [1, 1, 1]} : vector<1x8x32xf32> to vector<1x8x8xf32>
    %81 = vector.extract_strided_slice %39 {offsets = [0, 0, 16], sizes = [1, 8, 8], strides = [1, 1, 1]} : vector<1x8x32xf32> to vector<1x8x8xf32>
    "tpu.trace_start"() <{level = 10 : i32, message = "bqd,bkd->bqk"}> : () -> ()
    %cst_28 = arith.constant dense<0.000000e+00> : vector<1x8x8xf32>
    %82 = tpu.matmul %79, %80, %cst_28 {dimension_numbers = #tpu.dot_dimension_numbers<[2], [2], [1], [1], [0, 0, 0, 1, 1, 1], [0], [0]>} : vector<1x8x8xf32>, vector<1x8x8xf32>, vector<1x8x8xf32> -> vector<1x8x8xf32>
    "tpu.trace_stop"() : () -> ()
    %cst_29 = arith.constant dense<0xFF800000> : vector<1x8xf32>
    %83 = vector.multi_reduction <maximumf>, %82, %cst_29 [2] : vector<1x8x8xf32> to vector<1x8xf32>
    %84 = vector.shape_cast %83 : vector<1x8xf32> to vector<1x8x1xf32>
    %85 = vector.broadcast %84 : vector<1x8x1xf32> to vector<1x8x8xf32>
    %86 = arith.subf %82, %85 : vector<1x8x8xf32>
    %87 = math.exp %86 : vector<1x8x8xf32>
    %cst_30 = arith.constant dense<0.000000e+00> : vector<1x8xf32>
    %88 = vector.multi_reduction <add>, %87, %cst_30 [2] : vector<1x8x8xf32> to vector<1x8xf32>
    %89 = vector.shape_cast %88 : vector<1x8xf32> to vector<1x8x1xf32>
    %90 = tpu.reciprocal %89 {approx = true} : vector<1x8x1xf32> -> vector<1x8x1xf32>
    %91 = vector.broadcast %90 : vector<1x8x1xf32> to vector<1x8x8xf32>
    %92 = arith.mulf %87, %91 : vector<1x8x8xf32>
    "tpu.trace_start"() <{level = 10 : i32, message = "bqk,bkd->bqd"}> : () -> ()
    %cst_31 = arith.constant dense<0.000000e+00> : vector<1x8x8xf32>
    %93 = tpu.matmul %92, %81, %cst_31 {dimension_numbers = #tpu.dot_dimension_numbers<[2], [1], [1], [2], [0, 0, 0, 1, 1, 2], [0], [0]>} : vector<1x8x8xf32>, vector<1x8x8xf32>, vector<1x8x8xf32> -> vector<1x8x8xf32>
    "tpu.trace_stop"() : () -> ()
    %94 = vector.shape_cast %93 : vector<1x8x8xf32> to vector<8x8xf32>
    %c16 = arith.constant 16 : index
    %c0_32 = arith.constant 0 : index
    %95 = vector.load %arg5[%c16, %c0_32] : memref<32x32xf32, #tpu.memory_space<vmem>>, vector<8x32xf32>
    %cst_33 = arith.constant dense<0.000000e+00> : vector<8x32xf32>
    %96 = tpu.matmul %94, %95, %cst_33 {dimension_numbers = #tpu.dot_dimension_numbers<[1], [0], [0], [1], [0, 0, 1, 1], [], []>} : vector<8x8xf32>, vector<8x32xf32>, vector<8x32xf32> -> vector<8x32xf32>
    %97 = arith.addf %78, %96 : vector<8x32xf32>
    %98 = vector.extract_strided_slice %37 {offsets = [0, 0, 24], sizes = [1, 8, 8], strides = [1, 1, 1]} : vector<1x8x32xf32> to vector<1x8x8xf32>
    %99 = vector.extract_strided_slice %38 {offsets = [0, 0, 24], sizes = [1, 8, 8], strides = [1, 1, 1]} : vector<1x8x32xf32> to vector<1x8x8xf32>
    %100 = vector.extract_strided_slice %39 {offsets = [0, 0, 24], sizes = [1, 8, 8], strides = [1, 1, 1]} : vector<1x8x32xf32> to vector<1x8x8xf32>
    "tpu.trace_start"() <{level = 10 : i32, message = "bqd,bkd->bqk"}> : () -> ()
    %cst_34 = arith.constant dense<0.000000e+00> : vector<1x8x8xf32>
    %101 = tpu.matmul %98, %99, %cst_34 {dimension_numbers = #tpu.dot_dimension_numbers<[2], [2], [1], [1], [0, 0, 0, 1, 1, 1], [0], [0]>} : vector<1x8x8xf32>, vector<1x8x8xf32>, vector<1x8x8xf32> -> vector<1x8x8xf32>
    "tpu.trace_stop"() : () -> ()
    %cst_35 = arith.constant dense<0xFF800000> : vector<1x8xf32>
    %102 = vector.multi_reduction <maximumf>, %101, %cst_35 [2] : vector<1x8x8xf32> to vector<1x8xf32>
    %103 = vector.shape_cast %102 : vector<1x8xf32> to vector<1x8x1xf32>
    %104 = vector.broadcast %103 : vector<1x8x1xf32> to vector<1x8x8xf32>
    %105 = arith.subf %101, %104 : vector<1x8x8xf32>
    %106 = math.exp %105 : vector<1x8x8xf32>
    %cst_36 = arith.constant dense<0.000000e+00> : vector<1x8xf32>
    %107 = vector.multi_reduction <add>, %106, %cst_36 [2] : vector<1x8x8xf32> to vector<1x8xf32>
    %108 = vector.shape_cast %107 : vector<1x8xf32> to vector<1x8x1xf32>
    %109 = tpu.reciprocal %108 {approx = true} : vector<1x8x1xf32> -> vector<1x8x1xf32>
    %110 = vector.broadcast %109 : vector<1x8x1xf32> to vector<1x8x8xf32>
    %111 = arith.mulf %106, %110 : vector<1x8x8xf32>
    "tpu.trace_start"() <{level = 10 : i32, message = "bqk,bkd->bqd"}> : () -> ()
    %cst_37 = arith.constant dense<0.000000e+00> : vector<1x8x8xf32>
    %112 = tpu.matmul %111, %100, %cst_37 {dimension_numbers = #tpu.dot_dimension_numbers<[2], [1], [1], [2], [0, 0, 0, 1, 1, 2], [0], [0]>} : vector<1x8x8xf32>, vector<1x8x8xf32>, vector<1x8x8xf32> -> vector<1x8x8xf32>
    "tpu.trace_stop"() : () -> ()
    %113 = vector.shape_cast %112 : vector<1x8x8xf32> to vector<8x8xf32>
    %c24 = arith.constant 24 : index
    %c0_38 = arith.constant 0 : index
    %114 = vector.load %arg5[%c24, %c0_38] : memref<32x32xf32, #tpu.memory_space<vmem>>, vector<8x32xf32>
    %cst_39 = arith.constant dense<0.000000e+00> : vector<8x32xf32>
    %115 = tpu.matmul %113, %114, %cst_39 {dimension_numbers = #tpu.dot_dimension_numbers<[1], [0], [0], [1], [0, 0, 1, 1], [], []>} : vector<8x8xf32>, vector<8x32xf32>, vector<8x32xf32> -> vector<8x32xf32>
    %116 = arith.addf %97, %115 : vector<8x32xf32>
    %117 = arith.addf %1, %116 : vector<8x32xf32>
    %c0_40 = arith.constant 0 : index
    %c0_41 = arith.constant 0 : index
    %118 = vector.load %arg6[%c0_40, %c0_41] : memref<1x32xf32, #tpu.memory_space<vmem>>, vector<1x32xf32>
    %119 = vector.shape_cast %118 : vector<1x32xf32> to vector<32xf32>
    %120 = vector.shape_cast %119 : vector<32xf32> to vector<1x32xf32>
    %121 = vector.broadcast %120 : vector<1x32xf32> to vector<8x32xf32>
    %122 = arith.addf %117, %121 : vector<8x32xf32>
    %c0_42 = arith.constant 0 : index
    %c0_43 = arith.constant 0 : index
    %123 = vector.load %arg7[%c0_42, %c0_43] : memref<1x32xf32, #tpu.memory_space<vmem>>, vector<1x32xf32>
    %124 = vector.shape_cast %123 : vector<1x32xf32> to vector<32xf32>
    %c0_44 = arith.constant 0 : index
    %c0_45 = arith.constant 0 : index
    %125 = vector.load %arg8[%c0_44, %c0_45] : memref<1x32xf32, #tpu.memory_space<vmem>>, vector<1x32xf32>
    %126 = vector.shape_cast %125 : vector<1x32xf32> to vector<32xf32>
    %cst_46 = arith.constant dense<0.000000e+00> : vector<8xf32>
    %127 = vector.multi_reduction <add>, %122, %cst_46 [1] : vector<8x32xf32> to vector<8xf32>
    %128 = vector.shape_cast %127 : vector<8xf32> to vector<8x1xf32>
    %cst_47 = arith.constant 3.200000e+01 : f32
    %129 = vector.broadcast %cst_47 : f32 to vector<8x1xf32>
    %130 = arith.divf %128, %129 : vector<8x1xf32>
    %131 = vector.broadcast %130 : vector<8x1xf32> to vector<8x32xf32>
    %132 = arith.subf %122, %131 : vector<8x32xf32>
    %133 = arith.mulf %132, %132 : vector<8x32xf32>
    %cst_48 = arith.constant dense<0.000000e+00> : vector<8xf32>
    %134 = vector.multi_reduction <add>, %133, %cst_48 [1] : vector<8x32xf32> to vector<8xf32>
    %135 = vector.shape_cast %134 : vector<8xf32> to vector<8x1xf32>
    %cst_49 = arith.constant 3.200000e+01 : f32
    %136 = vector.broadcast %cst_49 : f32 to vector<8x1xf32>
    %137 = arith.divf %135, %136 : vector<8x1xf32>
    %138 = vector.broadcast %130 : vector<8x1xf32> to vector<8x32xf32>
    %139 = arith.subf %122, %138 : vector<8x32xf32>
    %cst_50 = arith.constant 9.99999974E-6 : f32
    %140 = vector.broadcast %cst_50 : f32 to vector<8x1xf32>
    %141 = arith.addf %137, %140 : vector<8x1xf32>
    %142 = math.rsqrt %141 : vector<8x1xf32>
    %143 = vector.broadcast %142 : vector<8x1xf32> to vector<8x32xf32>
    %144 = arith.mulf %139, %143 : vector<8x32xf32>
    %145 = vector.shape_cast %124 : vector<32xf32> to vector<1x32xf32>
    %146 = vector.broadcast %145 : vector<1x32xf32> to vector<8x32xf32>
    %147 = arith.mulf %144, %146 : vector<8x32xf32>
    %148 = vector.shape_cast %126 : vector<32xf32> to vector<1x32xf32>
    %149 = vector.broadcast %148 : vector<1x32xf32> to vector<8x32xf32>
    %150 = arith.addf %147, %149 : vector<8x32xf32>
    %c0_51 = arith.constant 0 : index
    %c0_52 = arith.constant 0 : index
    %151 = vector.load %arg9[%c0_51, %c0_52] : memref<32x128xf32, #tpu.memory_space<vmem>>, vector<32x128xf32>
    %cst_53 = arith.constant dense<0.000000e+00> : vector<8x128xf32>
    %152 = tpu.matmul %150, %151, %cst_53 {dimension_numbers = #tpu.dot_dimension_numbers<[1], [0], [0], [1], [0, 0, 1, 1], [], []>} : vector<8x32xf32>, vector<32x128xf32>, vector<8x128xf32> -> vector<8x128xf32>
    %c0_54 = arith.constant 0 : index
    %c0_55 = arith.constant 0 : index
    %153 = vector.load %arg10[%c0_54, %c0_55] : memref<1x128xf32, #tpu.memory_space<vmem>>, vector<1x128xf32>
    %154 = vector.shape_cast %153 : vector<1x128xf32> to vector<128xf32>
    %155 = vector.shape_cast %154 : vector<128xf32> to vector<1x128xf32>
    %156 = vector.broadcast %155 : vector<1x128xf32> to vector<8x128xf32>
    %157 = arith.addf %152, %156 : vector<8x128xf32>
    %cst_56 = arith.constant 5.000000e-01 : f32
    %158 = vector.broadcast %cst_56 : f32 to vector<8x128xf32>
    %159 = arith.mulf %158, %157 : vector<8x128xf32>
    %cst_57 = arith.constant 0.707106769 : f32
    %160 = vector.broadcast %cst_57 : f32 to vector<8x128xf32>
    %161 = arith.mulf %157, %160 : vector<8x128xf32>
    %162 = math.erf %161 : vector<8x128xf32>
    %cst_58 = arith.constant 1.000000e+00 : f32
    %163 = vector.broadcast %cst_58 : f32 to vector<8x128xf32>
    %164 = arith.addf %163, %162 : vector<8x128xf32>
    %165 = arith.mulf %159, %164 : vector<8x128xf32>
    %c0_59 = arith.constant 0 : index
    %c0_60 = arith.constant 0 : index
    %166 = vector.load %arg11[%c0_59, %c0_60] : memref<128x32xf32, #tpu.memory_space<vmem>>, vector<128x32xf32>
    %cst_61 = arith.constant dense<0.000000e+00> : vector<8x32xf32>
    %167 = tpu.matmul %165, %166, %cst_61 {dimension_numbers = #tpu.dot_dimension_numbers<[1], [0], [0], [1], [0, 0, 1, 1], [], []>} : vector<8x128xf32>, vector<128x32xf32>, vector<8x32xf32> -> vector<8x32xf32>
    %c0_62 = arith.constant 0 : index
    %c0_63 = arith.constant 0 : index
    %168 = vector.load %arg12[%c0_62, %c0_63] : memref<1x32xf32, #tpu.memory_space<vmem>>, vector<1x32xf32>
    %169 = vector.shape_cast %168 : vector<1x32xf32> to vector<32xf32>
    %170 = vector.shape_cast %169 : vector<32xf32> to vector<1x32xf32>
    %171 = vector.broadcast %170 : vector<1x32xf32> to vector<8x32xf32>
    %172 = arith.addf %167, %171 : vector<8x32xf32>
    %173 = arith.addf %122, %172 : vector<8x32xf32>
    %174 = vector.shape_cast %173 : vector<8x32xf32> to vector<1x8x32xf32>
    %c0_64 = arith.constant 0 : index
    %c0_65 = arith.constant 0 : index
    %c0_66 = arith.constant 0 : index
    %175 = vector.load %arg13[%c0_64, %c0_65, %c0_66] : memref<1x8x32xf32, #tpu.memory_space<vmem>>, vector<1x8x32xf32>
    tpu.vector_store %arg13[%c0_64, %c0_65, %c0_66], %174 {strides = array<i32>} : memref<1x8x32xf32, #tpu.memory_space<vmem>>, vector<1x8x32xf32>,
    return
  }
  func.func @transform_0(%arg0: i32) -> (i32, i32, i32) {
    %c0_i32 = arith.constant 0 : i32
    %c0_i32_0 = arith.constant 0 : i32
    %c0_i32_1 = arith.constant 0 : i32
    return %arg0, %c0_i32, %c0_i32_0 : i32, i32, i32
  }
  func.func @transform_1(%arg0: i32) -> (i32, i32) {
    %c0_i32 = arith.constant 0 : i32
    %c0_i32_0 = arith.constant 0 : i32
    %c0_i32_1 = arith.constant 0 : i32
    return %c0_i32, %c0_i32_0 : i32, i32
  }
  func.func @transform_2(%arg0: i32) -> (i32, i32) {
    %c0_i32 = arith.constant 0 : i32
    %c0_i32_0 = arith.constant 0 : i32
    %c0_i32_1 = arith.constant 0 : i32
    return %c0_i32, %c0_i32_0 : i32, i32
  }
  func.func @transform_3(%arg0: i32) -> (i32, i32) {
    %c0_i32 = arith.constant 0 : i32
    %c0_i32_0 = arith.constant 0 : i32
    %c0_i32_1 = arith.constant 0 : i32
    return %c0_i32, %c0_i32_0 : i32, i32
  }
  func.func @transform_4(%arg0: i32) -> (i32, i32) {
    %c0_i32 = arith.constant 0 : i32
    %c0_i32_0 = arith.constant 0 : i32
    %c0_i32_1 = arith.constant 0 : i32
    return %c0_i32, %c0_i32_0 : i32, i32
  }
  func.func @transform_5(%arg0: i32) -> (i32, i32) {
    %c0_i32 = arith.constant 0 : i32
    %c0_i32_0 = arith.constant 0 : i32
    %c0_i32_1 = arith.constant 0 : i32
    return %c0_i32, %c0_i32_0 : i32, i32
  }
  func.func @transform_6(%arg0: i32) -> (i32, i32) {
    %c0_i32 = arith.constant 0 : i32
    %c0_i32_0 = arith.constant 0 : i32
    %c0_i32_1 = arith.constant 0 : i32
    return %c0_i32, %c0_i32_0 : i32, i32
  }
  func.func @transform_7(%arg0: i32) -> (i32, i32) {
    %c0_i32 = arith.constant 0 : i32
    %c0_i32_0 = arith.constant 0 : i32
    %c0_i32_1 = arith.constant 0 : i32
    return %c0_i32, %c0_i32_0 : i32, i32
  }
  func.func @transform_8(%arg0: i32) -> (i32, i32) {
    %c0_i32 = arith.constant 0 : i32
    %c0_i32_0 = arith.constant 0 : i32
    %c0_i32_1 = arith.constant 0 : i32
    return %c0_i32, %c0_i32_0 : i32, i32
  }
  func.func @transform_9(%arg0: i32) -> (i32, i32) {
    %c0_i32 = arith.constant 0 : i32
    %c0_i32_0 = arith.constant 0 : i32
    %c0_i32_1 = arith.constant 0 : i32
    return %c0_i32, %c0_i32_0 : i32, i32
  }
  func.func @transform_10(%arg0: i32) -> (i32, i32) {
    %c0_i32 = arith.constant 0 : i32
    %c0_i32_0 = arith.constant 0 : i32
    %c0_i32_1 = arith.constant 0 : i32
    return %c0_i32, %c0_i32_0 : i32, i32
  }
  func.func @transform_11(%arg0: i32) -> (i32, i32) {
    %c0_i32 = arith.constant 0 : i32
    %c0_i32_0 = arith.constant 0 : i32
    %c0_i32_1 = arith.constant 0 : i32
    return %c0_i32, %c0_i32_0 : i32, i32
  }
  func.func @transform_12(%arg0: i32) -> (i32, i32, i32) {
    %c0_i32 = arith.constant 0 : i32
    %c0_i32_0 = arith.constant 0 : i32
    %c0_i32_1 = arith.constant 0 : i32
    return %arg0, %c0_i32, %c0_i32_0 : i32, i32, i32
  }
}

</mosaic_0001>

<llo_original>
// kernel: tpu_custom_call.1
$region0: #{tpu_custom_call.1}
  #allocation0 [shape = 'u32[]', space=smem, size = 0x4, offset = 0x4, fixed_abs, tag = 'smem constant byte address 0x4 - core index']
  #allocation1 [shape = 'u32[144,128]{1,0:T(1,128)}', space=vmem, size = 0x12000, scoped, tag = 'internal scratch']
  %s0 = inlined_call_operand.vmem [shape: f32[2,8,32], index: 0, kind: input, shape index: {}]
  %s1 = inlined_call_operand.vmem [shape: f32[1,32], index: 1, kind: input, shape index: {}]
  %s2 = inlined_call_operand.vmem [shape: f32[1,32], index: 2, kind: input, shape index: {}]
  %s3 = inlined_call_operand.vmem [shape: f32[32,96], index: 3, kind: input, shape index: {}]
  %s4 = inlined_call_operand.vmem [shape: f32[32,32], index: 4, kind: input, shape index: {}]
  %s5 = inlined_call_operand.vmem [shape: f32[1,32], index: 5, kind: input, shape index: {}]
  %s6 = inlined_call_operand.vmem [shape: f32[1,32], index: 6, kind: input, shape index: {}]
  %s7 = inlined_call_operand.vmem [shape: f32[1,32], index: 7, kind: input, shape index: {}]
  %s8 = inlined_call_operand.vmem [shape: f32[32,128], index: 8, kind: input, shape index: {}]
  %s9 = inlined_call_operand.vmem [shape: f32[1,128], index: 9, kind: input, shape index: {}]
  %s10 = inlined_call_operand.vmem [shape: f32[128,32], index: 10, kind: input, shape index: {}]
  %s11 = inlined_call_operand.vmem [shape: f32[1,32], index: 11, kind: input, shape index: {}]
  %s12 = inlined_call_operand.hbm [shape: f32[2,8,32], index: 12, kind: output, shape index: {}]
  %s13 = sld [smem:[#allocation0]]
  $region81: #{tpu_custom_call.1} parent=0
    _
  %s15 = ssub.s32 1, %s13
  %s16 = scalar_select 0, %s15, %s13
  $region1: #{tpu_custom_call.1} parent=0
    #allocation2 [shape = 'u8[8192]{0}', space=vmem, size = 0x2000, scoped, tag = 'output window, operand 0']
    #allocation3 [shape = 's32[2]{0}', space=sflag, size = 0x8, scoped, tag = 'scoped memory for tpu_custom_call.1']
    %17 = vsyncpa [#allocation3], 0
    %s18 = scalar_lea.sflag [#allocation3], 1
    %19 = vsyncpa %s18, 0
    loop: start=0, step=1, limit=4
    $region2: #{tpu_custom_call.1} parent=1 // loop_pre_header
      _
    $region3: #{tpu_custom_call.1} parent=1 // loop_header
      %s21 = sphi 0, %s25
      %p22 = scmp.ge.s32.totalorder %s21, 4
      %s31 = sphi 0, %s33
      %s34 = sphi 0, %s31
      %s35 = sphi 0, %s34
      %s51 = sphi 0, %s35
      %s55 = sphi 0, %s55
      %s57 = sphi 0, %s55
      %s58 = sphi 0, %s57
      %s72 = sphi 0, %s58
      %s76 = sphi 0, %s76
      %s78 = sphi 0, %s76
      %s79 = sphi 0, %s78
      %s93 = sphi 0, %s79
      %s97 = sphi 0, %s97
      %s99 = sphi 0, %s97
      %s100 = sphi 0, %s99
      %s114 = sphi 0, %s100
      %s118 = sphi 0, %s118
      %s120 = sphi 0, %s118
      %s121 = sphi 0, %s120
      %s135 = sphi 0, %s121
      %s139 = sphi 0, %s139
      %s141 = sphi 0, %s139
      %s142 = sphi 0, %s141
      %s156 = sphi 0, %s142
      %s160 = sphi 0, %s160
      %s162 = sphi 0, %s160
      %s163 = sphi 0, %s162
      %s177 = sphi 0, %s163
      %s181 = sphi 0, %s181
      %s183 = sphi 0, %s181
      %s184 = sphi 0, %s183
      %s198 = sphi 0, %s184
      %s202 = sphi 0, %s202
      %s204 = sphi 0, %s202
      %s205 = sphi 0, %s204
      %s219 = sphi 0, %s205
      %s223 = sphi 0, %s223
      %s225 = sphi 0, %s223
      %s226 = sphi 0, %s225
      %s240 = sphi 0, %s226
      %s244 = sphi 0, %s244
      %s246 = sphi 0, %s244
      %s247 = sphi 0, %s246
      %s261 = sphi 0, %s247
      %s265 = sphi 0, %s265
      %s267 = sphi 0, %s265
      %s268 = sphi 0, %s267
      %s282 = sphi 0, %s268
      %s288 = sphi 0, %s290
      %s291 = sphi 0, %s288
      %s292 = sphi 0, %s291
      %s308 = sphi 0, %s292
    $region4: #{tpu_custom_call.1} parent=1 // loop_header_branch
      %24 = sbr.rel (%p22) target = $region8
    $region5: #{tpu_custom_call.1} parent=1 // loop_body
      %s26 = ssub.s32 %s21, 1
      %s27 = ssub.s32 %s21, 2
      %s28 = sadd.s32 %s21, 1
      %s29 = ssub.s32 %s21, %s28
      %p30 = scmp.eq.s32.totalorder %s29, 0
      %s32 = sadd.s32 %s31, 1
      %s33 = scalar_select %p30, %s31, %s32
      %p36 = pneg %p30
      %p37 = scmp.eq.s32.totalorder %s21, 1
      %p38 = por %p36, %p37
      %p39 = scmp.ne.s32.totalorder %s31, %s34
      %p40 = scmp.eq.s32.totalorder %s21, 0
      %p41 = por %p39, %p40
      %p42 = scmp.ne.s32.totalorder %s31, %s34
      %p43 = scmp.eq.s32.totalorder %s26, 1
      %p44 = por %p42, %p43
      %p45 = scmp.ne.s32.totalorder %s34, %s35
      %p46 = scmp.eq.s32.totalorder %s26, 0
      %p47 = por %p45, %p46
      %p48 = scmp.ne.s32.totalorder %s34, %s35
      %p49 = scmp.eq.s32.totalorder %s27, 1
      %p50 = por %p48, %p49
      %p52 = scmp.ne.s32.totalorder %s35, %s51
      %p53 = scmp.eq.s32.totalorder %s27, 0
      %p54 = por %p52, %p53
      %s56 = sadd.s32 %s55, 1
      %p59 = scmp.eq.s32.totalorder %s21, 1
      %p60 = scmp.ne.s32.totalorder %s55, %s57
      %p61 = scmp.eq.s32.totalorder %s21, 0
      %p62 = por %p60, %p61
      %p63 = scmp.ne.s32.totalorder %s55, %s57
      %p64 = scmp.eq.s32.totalorder %s26, 1
      %p65 = por %p63, %p64
      %p66 = scmp.ne.s32.totalorder %s57, %s58
      %p67 = scmp.eq.s32.totalorder %s26, 0
      %p68 = por %p66, %p67
      %p69 = scmp.ne.s32.totalorder %s57, %s58
      %p70 = scmp.eq.s32.totalorder %s27, 1
      %p71 = por %p69, %p70
      %p73 = scmp.ne.s32.totalorder %s58, %s72
      %p74 = scmp.eq.s32.totalorder %s27, 0
      %p75 = por %p73, %p74
      %s77 = sadd.s32 %s76, 1
      %p80 = scmp.eq.s32.totalorder %s21, 1
      %p81 = scmp.ne.s32.totalorder %s76, %s78
      %p82 = scmp.eq.s32.totalorder %s21, 0
      %p83 = por %p81, %p82
      %p84 = scmp.ne.s32.totalorder %s76, %s78
      %p85 = scmp.eq.s32.totalorder %s26, 1
      %p86 = por %p84, %p85
      %p87 = scmp.ne.s32.totalorder %s78, %s79
      %p88 = scmp.eq.s32.totalorder %s26, 0
      %p89 = por %p87, %p88
      %p90 = scmp.ne.s32.totalorder %s78, %s79
      %p91 = scmp.eq.s32.totalorder %s27, 1
      %p92 = por %p90, %p91
      %p94 = scmp.ne.s32.totalorder %s79, %s93
      %p95 = scmp.eq.s32.totalorder %s27, 0
      %p96 = por %p94, %p95
      %s98 = sadd.s32 %s97, 1
      %p101 = scmp.eq.s32.totalorder %s21, 1
      %p102 = scmp.ne.s32.totalorder %s97, %s99
      %p103 = scmp.eq.s32.totalorder %s21, 0
      %p104 = por %p102, %p103
      %p105 = scmp.ne.s32.totalorder %s97, %s99
      %p106 = scmp.eq.s32.totalorder %s26, 1
      %p107 = por %p105, %p106
      %p108 = scmp.ne.s32.totalorder %s99, %s100
      %p109 = scmp.eq.s32.totalorder %s26, 0
      %p110 = por %p108, %p109
      %p111 = scmp.ne.s32.totalorder %s99, %s100
      %p112 = scmp.eq.s32.totalorder %s27, 1
      %p113 = por %p111, %p112
      %p115 = scmp.ne.s32.totalorder %s100, %s114
      %p116 = scmp.eq.s32.totalorder %s27, 0
      %p117 = por %p115, %p116
      %s119 = sadd.s32 %s118, 1
      %p122 = scmp.eq.s32.totalorder %s21, 1
      %p123 = scmp.ne.s32.totalorder %s118, %s120
      %p124 = scmp.eq.s32.totalorder %s21, 0
      %p125 = por %p123, %p124
      %p126 = scmp.ne.s32.totalorder %s118, %s120
      %p127 = scmp.eq.s32.totalorder %s26, 1
      %p128 = por %p126, %p127
      %p129 = scmp.ne.s32.totalorder %s120, %s121
      %p130 = scmp.eq.s32.totalorder %s26, 0
      %p131 = por %p129, %p130
      %p132 = scmp.ne.s32.totalorder %s120, %s121
      %p133 = scmp.eq.s32.totalorder %s27, 1
      %p134 = por %p132, %p133
      %p136 = scmp.ne.s32.totalorder %s121, %s135
      %p137 = scmp.eq.s32.totalorder %s27, 0
      %p138 = por %p136, %p137
      %s140 = sadd.s32 %s139, 1
      %p143 = scmp.eq.s32.totalorder %s21, 1
      %p144 = scmp.ne.s32.totalorder %s139, %s141
      %p145 = scmp.eq.s32.totalorder %s21, 0
      %p146 = por %p144, %p145
      %p147 = scmp.ne.s32.totalorder %s139, %s141
      %p148 = scmp.eq.s32.totalorder %s26, 1
      %p149 = por %p147, %p148
      %p150 = scmp.ne.s32.totalorder %s141, %s142
      %p151 = scmp.eq.s32.totalorder %s26, 0
      %p152 = por %p150, %p151
      %p153 = scmp.ne.s32.totalorder %s141, %s142
      %p154 = scmp.eq.s32.totalorder %s27, 1
      %p155 = por %p153, %p154
      %p157 = scmp.ne.s32.totalorder %s142, %s156
      %p158 = scmp.eq.s32.totalorder %s27, 0
      %p159 = por %p157, %p158
      %s161 = sadd.s32 %s160, 1
      %p164 = scmp.eq.s32.totalorder %s21, 1
      %p165 = scmp.ne.s32.totalorder %s160, %s162
      %p166 = scmp.eq.s32.totalorder %s21, 0
      %p167 = por %p165, %p166
      %p168 = scmp.ne.s32.totalorder %s160, %s162
      %p169 = scmp.eq.s32.totalorder %s26, 1
      %p170 = por %p168, %p169
      %p171 = scmp.ne.s32.totalorder %s162, %s163
      %p172 = scmp.eq.s32.totalorder %s26, 0
      %p173 = por %p171, %p172
      %p174 = scmp.ne.s32.totalorder %s162, %s163
      %p175 = scmp.eq.s32.totalorder %s27, 1
      %p176 = por %p174, %p175
      %p178 = scmp.ne.s32.totalorder %s163, %s177
      %p179 = scmp.eq.s32.totalorder %s27, 0
      %p180 = por %p178, %p179
      %s182 = sadd.s32 %s181, 1
      %p185 = scmp.eq.s32.totalorder %s21, 1
      %p186 = scmp.ne.s32.totalorder %s181, %s183
      %p187 = scmp.eq.s32.totalorder %s21, 0
      %p188 = por %p186, %p187
      %p189 = scmp.ne.s32.totalorder %s181, %s183
      %p190 = scmp.eq.s32.totalorder %s26, 1
      %p191 = por %p189, %p190
      %p192 = scmp.ne.s32.totalorder %s183, %s184
      %p193 = scmp.eq.s32.totalorder %s26, 0
      %p194 = por %p192, %p193
      %p195 = scmp.ne.s32.totalorder %s183, %s184
      %p196 = scmp.eq.s32.totalorder %s27, 1
      %p197 = por %p195, %p196
      %p199 = scmp.ne.s32.totalorder %s184, %s198
      %p200 = scmp.eq.s32.totalorder %s27, 0
      %p201 = por %p199, %p200
      %s203 = sadd.s32 %s202, 1
      %p206 = scmp.eq.s32.totalorder %s21, 1
      %p207 = scmp.ne.s32.totalorder %s202, %s204
      %p208 = scmp.eq.s32.totalorder %s21, 0
      %p209 = por %p207, %p208
      %p210 = scmp.ne.s32.totalorder %s202, %s204
      %p211 = scmp.eq.s32.totalorder %s26, 1
      %p212 = por %p210, %p211
      %p213 = scmp.ne.s32.totalorder %s204, %s205
      %p214 = scmp.eq.s32.totalorder %s26, 0
      %p215 = por %p213, %p214
      %p216 = scmp.ne.s32.totalorder %s204, %s205
      %p217 = scmp.eq.s32.totalorder %s27, 1
      %p218 = por %p216, %p217
      %p220 = scmp.ne.s32.totalorder %s205, %s219
      %p221 = scmp.eq.s32.totalorder %s27, 0
      %p222 = por %p220, %p221
      %s224 = sadd.s32 %s223, 1
      %p227 = scmp.eq.s32.totalorder %s21, 1
      %p228 = scmp.ne.s32.totalorder %s223, %s225
      %p229 = scmp.eq.s32.totalorder %s21, 0
      %p230 = por %p228, %p229
      %p231 = scmp.ne.s32.totalorder %s223, %s225
      %p232 = scmp.eq.s32.totalorder %s26, 1
      %p233 = por %p231, %p232
      %p234 = scmp.ne.s32.totalorder %s225, %s226
      %p235 = scmp.eq.s32.totalorder %s26, 0
      %p236 = por %p234, %p235
      %p237 = scmp.ne.s32.totalorder %s225, %s226
      %p238 = scmp.eq.s32.totalorder %s27, 1
      %p239 = por %p237, %p238
      %p241 = scmp.ne.s32.totalorder %s226, %s240
      %p242 = scmp.eq.s32.totalorder %s27, 0
      %p243 = por %p241, %p242
      %s245 = sadd.s32 %s244, 1
      %p248 = scmp.eq.s32.totalorder %s21, 1
      %p249 = scmp.ne.s32.totalorder %s244, %s246
      %p250 = scmp.eq.s32.totalorder %s21, 0
      %p251 = por %p249, %p250
      %p252 = scmp.ne.s32.totalorder %s244, %s246
      %p253 = scmp.eq.s32.totalorder %s26, 1
      %p254 = por %p252, %p253
      %p255 = scmp.ne.s32.totalorder %s246, %s247
      %p256 = scmp.eq.s32.totalorder %s26, 0
      %p257 = por %p255, %p256
      %p258 = scmp.ne.s32.totalorder %s246, %s247
      %p259 = scmp.eq.s32.totalorder %s27, 1
      %p260 = por %p258, %p259
      %p262 = scmp.ne.s32.totalorder %s247, %s261
      %p263 = scmp.eq.s32.totalorder %s27, 0
      %p264 = por %p262, %p263
      %s266 = sadd.s32 %s265, 1
      %p269 = scmp.eq.s32.totalorder %s21, 1
      %p270 = scmp.ne.s32.totalorder %s265, %s267
      %p271 = scmp.eq.s32.totalorder %s21, 0
      %p272 = por %p270, %p271
      %p273 = scmp.ne.s32.totalorder %s265, %s267
      %p274 = scmp.eq.s32.totalorder %s26, 1
      %p275 = por %p273, %p274
      %p276 = scmp.ne.s32.totalorder %s267, %s268
      %p277 = scmp.eq.s32.totalorder %s26, 0
      %p278 = por %p276, %p277
      %p279 = scmp.ne.s32.totalorder %s267, %s268
      %p280 = scmp.eq.s32.totalorder %s27, 1
      %p281 = por %p279, %p280
      %p283 = scmp.ne.s32.totalorder %s268, %s282
      %p284 = scmp.eq.s32.totalorder %s27, 0
      %p285 = por %p283, %p284
      %s286 = ssub.s32 %s21, %s28
      %p287 = scmp.eq.s32.totalorder %s286, 0
      %s289 = sadd.s32 %s288, 1
      %s290 = scalar_select %p287, %s288, %s289
      %p293 = pneg %p287
      %p294 = scmp.eq.s32.totalorder %s21, 1
      %p295 = por %p293, %p294
      %p296 = scmp.ne.s32.totalorder %s288, %s291
      %p297 = scmp.eq.s32.totalorder %s21, 0
      %p298 = por %p296, %p297
      %p299 = scmp.ne.s32.totalorder %s288, %s291
      %p300 = scmp.eq.s32.totalorder %s26, 1
      %p301 = por %p299, %p300
      %p302 = scmp.ne.s32.totalorder %s291, %s292
      %p303 = scmp.eq.s32.totalorder %s26, 0
      %p304 = por %p302, %p303
      %p305 = scmp.ne.s32.totalorder %s291, %s292
      %p306 = scmp.eq.s32.totalorder %s27, 1
      %p307 = por %p305, %p306
      %p309 = scmp.ne.s32.totalorder %s292, %s308
      %p310 = scmp.eq.s32.totalorder %s27, 0
      %p311 = por %p309, %p310
      %p312 = scmp.le.s32.totalorder 1, %s21
      %p313 = scmp.lt.s32.totalorder %s21, 3
      %p314 = pnand %p312, %p313
      %p315 = pneg %p314
      // Predicated region
      $region9: #{tpu_custom_call.1} parent=5 // pred_check
        _
      $region10: #{tpu_custom_call.1} parent=5 // pred_check_branch
        %317 = sbr.rel (%p314) target = $region12
      $region11: #{tpu_custom_call.1} parent=5 // pred_region
        %s318 = ssub.s32 %s21, 1
        // Predicated region
        $region13: #{tpu_custom_call.1} parent=11 // pred_check
          %p319 = pneg %p68
        $region14: #{tpu_custom_call.1} parent=11 // pred_check_branch
          %321 = sbr.rel (%p319) target = $region16
        $region15: #{tpu_custom_call.1} parent=11 // pred_region
          _
        $region16: #{tpu_custom_call.1} parent=11 // pred_fallthru
          _
        // Predicated region
        $region17: #{tpu_custom_call.1} parent=11 // pred_check
          %p322 = pneg %p89
        $region18: #{tpu_custom_call.1} parent=11 // pred_check_branch
          %324 = sbr.rel (%p322) target = $region20
        $region19: #{tpu_custom_call.1} parent=11 // pred_region
          _
        $region20: #{tpu_custom_call.1} parent=11 // pred_fallthru
          _
        // Predicated region
        $region21: #{tpu_custom_call.1} parent=11 // pred_check
          %p325 = pneg %p110
        $region22: #{tpu_custom_call.1} parent=11 // pred_check_branch
          %327 = sbr.rel (%p325) target = $region24
        $region23: #{tpu_custom_call.1} parent=11 // pred_region
          _
        $region24: #{tpu_custom_call.1} parent=11 // pred_fallthru
          _
        // Predicated region
        $region25: #{tpu_custom_call.1} parent=11 // pred_check
          %p328 = pneg %p131
        $region26: #{tpu_custom_call.1} parent=11 // pred_check_branch
          %330 = sbr.rel (%p328) target = $region28
        $region27: #{tpu_custom_call.1} parent=11 // pred_region
          _
        $region28: #{tpu_custom_call.1} parent=11 // pred_fallthru
          _
        // Predicated region
        $region29: #{tpu_custom_call.1} parent=11 // pred_check
          %p331 = pneg %p152
        $region30: #{tpu_custom_call.1} parent=11 // pred_check_branch
          %333 = sbr.rel (%p331) target = $region32
        $region31: #{tpu_custom_call.1} parent=11 // pred_region
          _
        $region32: #{tpu_custom_call.1} parent=11 // pred_fallthru
          _
        // Predicated region
        $region33: #{tpu_custom_call.1} parent=11 // pred_check
          %p334 = pneg %p173
        $region34: #{tpu_custom_call.1} parent=11 // pred_check_branch
          %336 = sbr.rel (%p334) target = $region36
        $region35: #{tpu_custom_call.1} parent=11 // pred_region
          _
        $region36: #{tpu_custom_call.1} parent=11 // pred_fallthru
          _
        // Predicated region
        $region37: #{tpu_custom_call.1} parent=11 // pred_check
          %p337 = pneg %p194
        $region38: #{tpu_custom_call.1} parent=11 // pred_check_branch
          %339 = sbr.rel (%p337) target = $region40
        $region39: #{tpu_custom_call.1} parent=11 // pred_region
          _
        $region40: #{tpu_custom_call.1} parent=11 // pred_fallthru
          _
        // Predicated region
        $region41: #{tpu_custom_call.1} parent=11 // pred_check
          %p340 = pneg %p215
        $region42: #{tpu_custom_call.1} parent=11 // pred_check_branch
          %342 = sbr.rel (%p340) target = $region44
        $region43: #{tpu_custom_call.1} parent=11 // pred_region
          _
        $region44: #{tpu_custom_call.1} parent=11 // pred_fallthru
          _
        // Predicated region
        $region45: #{tpu_custom_call.1} parent=11 // pred_check
          %p343 = pneg %p236
        $region46: #{tpu_custom_call.1} parent=11 // pred_check_branch
          %345 = sbr.rel (%p343) target = $region48
        $region47: #{tpu_custom_call.1} parent=11 // pred_region
          _
        $region48: #{tpu_custom_call.1} parent=11 // pred_fallthru
          _
        // Predicated region
        $region49: #{tpu_custom_call.1} parent=11 // pred_check
          %p346 = pneg %p257
        $region50: #{tpu_custom_call.1} parent=11 // pred_check_branch
          %348 = sbr.rel (%p346) target = $region52
        $region51: #{tpu_custom_call.1} parent=11 // pred_region
          _
        $region52: #{tpu_custom_call.1} parent=11 // pred_fallthru
          _
        // Predicated region
        $region53: #{tpu_custom_call.1} parent=11 // pred_check
          %p349 = pneg %p278
        $region54: #{tpu_custom_call.1} parent=11 // pred_check_branch
          %351 = sbr.rel (%p349) target = $region56
        $region55: #{tpu_custom_call.1} parent=11 // pred_region
          _
        $region56: #{tpu_custom_call.1} parent=11 // pred_fallthru
          _
      $region12: #{tpu_custom_call.1} parent=5 // pred_fallthru
        _
      %p352 = scmp.lt.s32.totalorder %s21, 2
      // Predicated region
      $region57: #{tpu_custom_call.1} parent=5 // pred_check
        %p353 = pneg %p352
      $region58: #{tpu_custom_call.1} parent=5 // pred_check_branch
        %355 = sbr.rel (%p353) target = $region60
      $region59: #{tpu_custom_call.1} parent=5 // pred_region
        // Predicated region
        $region61: #{tpu_custom_call.1} parent=59 // pred_check
          %p356 = pneg %p41
        $region62: #{tpu_custom_call.1} parent=59 // pred_check_branch
          %358 = sbr.rel (%p356) target = $region64
        $region63: #{tpu_custom_call.1} parent=59 // pred_region
          %p359 = scmp.lt.s32.totalorder %s21, 1
          %s360 = scalar_select %p359, %s21, 1
          %s361 = smul.addr %s360, 8
          %s362 = scalar_lea.vmem %s0, %s361
        $region64: #{tpu_custom_call.1} parent=59 // pred_fallthru
          _
      $region60: #{tpu_custom_call.1} parent=5 // pred_fallthru
        _
      %p363 = scmp.le.s32.totalorder 1, %s21
      %p364 = scmp.lt.s32.totalorder %s21, 3
      %p365 = pnand %p363, %p364
      %p366 = pneg %p365
      // Predicated region
      $region65: #{tpu_custom_call.1} parent=5 // pred_check
        _
      $region66: #{tpu_custom_call.1} parent=5 // pred_check_branch
        %368 = sbr.rel (%p365) target = $region68
      $region67: #{tpu_custom_call.1} parent=5 // pred_region
        %s369 = ssub.s32 %s21, 1
        %p370 = scmp.lt.s32.totalorder %s26, 1
        %s371 = scalar_select %p370, %s26, 1
        %s372 = smul.addr %s371, 8
        %s373 = scalar_lea.vmem %s0, %s372
        %p374 = pneg %p47
        %p375 = pneg %p44
        %p376 = pneg %p68
        %p377 = pneg %p65
        %p378 = pneg %p89
        %p379 = pneg %p86
        %p380 = pneg %p110
        %p381 = pneg %p107
        %p382 = pneg %p131
        %p383 = pneg %p128
        %p384 = pneg %p152
        %p385 = pneg %p149
        %p386 = pneg %p173
        %p387 = pneg %p170
        %p388 = pneg %p194
        %p389 = pneg %p191
        %p390 = pneg %p215
        %p391 = pneg %p212
        %p392 = pneg %p236
        %p393 = pneg %p233
        %p394 = pneg %p257
        %p395 = pneg %p254
        %p396 = pneg %p278
        %p397 = pneg %p275
        %p398 = pneg %p304
        %p399 = pneg %p301
        %s400 = sand.u32 %s291, 1
        %s401 = scalar_lea.sflag [#allocation3], %s400
        %s402 = sand.u32 %s291, 1
        %s403 = smul.addr %s402, 8
        %s404 = scalar_lea.vmem [#allocation2], %s403
        %p405 = scmp.lt.s32.totalorder %s26, 1
        %s406 = scalar_select %p405, %s26, 1
        %s407 = smul.addr %s406, 8
        %s408 = scalar_lea.vmem %s0, %s407
        %v409 = vld [vmem:[%s408] sm:$0xff]
        %v410 = vld [vmem:[%s1] sm:$0x1]
        %v411 = vld [vmem:[%s2] sm:$0x1]
        %vm412 = vcmask 261120
        %v413 = vsel %vm412, %v409, 0.0
        %414 = vadd.xlane.f32.xlu0 %v413
        %v415 = vpop.xlane.xlu0 %414
        %v416 = vrcp.pop 32.0
        %v417 = vmul.f32 %v415, %v416
        %v418 = vsub.f32 %v409, %v417
        %v419 = vmul.f32 %v418, %v418
        %v420 = vsel %vm412, %v419, 0.0
        %421 = vadd.xlane.f32.xlu0 %v420
        %v422 = vpop.xlane.xlu0 %421
        %v423 = vmul.f32 %v422, %v416
        %v424 = vadd.f32 %v423, 1e-05
        %v425 = vrsqrt.pop %v424
        %v426 = vmul.f32 %v418, %v425
        %v428 = vlaneseq
        %v429 = vshrl.u32 %v428, 7
        %v430 = vsub.s32 0, %v429
        %v431 = vrot.slane %v410, %v430
        %v433 = vmul.f32 %v426, %v431
        %v435 = vlaneseq
        %v436 = vshrl.u32 %v435, 7
        %v437 = vsub.s32 0, %v436
        %v438 = vrot.slane %v411, %v437
        %v440 = vadd.f32 %v433, %v438
        %v441 = vld [vmem:[%s3] sm:$0xff]
        %v442 = vld [vmem:[%s3 + $0x8] sm:$0xff]
        %v443 = vld [vmem:[%s3 + $0x10] sm:$0xff]
        %v444 = vld [vmem:[%s3 + $0x18] sm:$0xff]
        %v446 = vsel %vm412, %v440, 0
        %448 = vmatprep.subr.mxu0 0.0
        %449 = vmatpush1.msra.mxu0 0.0
        %450 = vmatprep.subr.mxu0 0.0
        %451 = vmatpush1.msra.mxu0 0.0
        %452 = vmatprep.subr.mxu0 0.0
        %453 = vmatpush1.msra.mxu0 0.0
        %454 = vmatprep.subr.mxu0 0.0
        %455 = vmatpush1.msra.mxu0 0.0
        %456 = vmatprep.subr.mxu0 0.0
        %457 = vmatpush1.msra.mxu0 0.0
        %458 = vmatprep.subr.mxu0 0.0
        %459 = vmatpush1.msra.mxu0 0.0
        %460 = vmatprep.subr.mxu0 0.0
        %461 = vmatpush1.msra.mxu0 0.0
        %462 = vmatprep.subr.mxu0 0.0
        %463 = vmatpush1.msra.mxu0 0.0
        %464 = vmatprep.subr.mxu0 0.0
        %465 = vmatpush1.msra.mxu0 0.0
        %466 = vmatprep.subr.mxu0 0.0
        %467 = vmatpush1.msra.mxu0 0.0
        %468 = vmatprep.subr.mxu0 0.0
        %469 = vmatpush1.msra.mxu0 0.0
        %470 = vmatprep.subr.mxu0 0.0
        %471 = vmatpush1.msra.mxu0 0.0
        %472 = vmatprep.subr.mxu0 0.0
        %473 = vmatpush1.msra.mxu0 %v444
        %474 = vmatprep.subr.mxu0 0.0
        %475 = vmatpush1.msra.mxu0 %v443
        %476 = vmatprep.subr.mxu0 0.0
        %477 = vmatpush1.msra.mxu0 %v442
        %478 = vmatprep.subr.mxu0 0.0
        %479 = vmatpush1.msra.mxu0 %v441
        %480 = vmatprep.subr.mxu0 0.0
        %481 = vmatpush2.msra.mxu0 0.0
        %482 = vmatprep.subr.mxu0 0.0
        %483 = vmatpush2.msra.mxu0 0.0
        %484 = vmatprep.subr.mxu0 0.0
        %485 = vmatpush2.msra.mxu0 0.0
        %486 = vmatprep.subr.mxu0 0.0
        %487 = vmatpush2.msra.mxu0 0.0
        %488 = vmatprep.subr.mxu0 0.0
        %489 = vmatpush2.msra.mxu0 0.0
        %490 = vmatprep.subr.mxu0 0.0
        %491 = vmatpush2.msra.mxu0 0.0
        %492 = vmatprep.subr.mxu0 0.0
        %493 = vmatpush2.msra.mxu0 0.0
        %494 = vmatprep.subr.mxu0 0.0
        %495 = vmatpush2.msra.mxu0 0.0
        %496 = vmatprep.subr.mxu0 0.0
        %497 = vmatpush2.msra.mxu0 0.0
        %498 = vmatprep.subr.mxu0 0.0
        %499 = vmatpush2.msra.mxu0 0.0
        %500 = vmatprep.subr.mxu0 0.0
        %501 = vmatpush2.msra.mxu0 0.0
        %502 = vmatprep.subr.mxu0 0.0
        %503 = vmatpush2.msra.mxu0 0.0
        %504 = vmatprep.subr.mxu0 0.0
        %505 = vmatpush2.msra.mxu0 0.0
        %506 = vmatprep.subr.mxu0 0.0
        %507 = vmatpush2.msra.mxu0 0.0
        %508 = vmatprep.subr.mxu0 0.0
        %509 = vmatpush2.msra.mxu0 0.0
        %510 = vmatprep.subr.mxu0 0.0
        %511 = vmatpush2.msra.mxu0 0.0
        %512 = vmatprep.mubr.f32.mxu0 0.0
        %513 = vmatmul.mubr.f32.gmra.mxu0 %v446
        %v514 = vpop.f32.mrf.mxu0
        %v515 = vadd.f32 0.0, %v514
        %v516 = vpop.f32.mrf.mxu0
        %517 = vdwg.mxu0
        %v518 = vmul.f32 %v515, 0.17677669
        %520 = vrot.lane.b32.xlu0 %v515, 96
        %v521 = vpop.permute.xlu0 %520
        %vm522 = vcmask 64512
        %v524 = vsel %vm522, %v518, 0
        %v526 = vsel %vm522, %v521, 0
        %528 = vmatprep.subr.mxu0 0.0
        %529 = vmatpush1.xpose.msra.mxu0 0.0
        %530 = vmatprep.subr.mxu0 0.0
        %531 = vmatpush1.xpose.msra.mxu0 0.0
        %532 = vmatprep.subr.mxu0 0.0
        %533 = vmatpush1.xpose.msra.mxu0 0.0
        %534 = vmatprep.subr.mxu0 0.0
        %535 = vmatpush1.xpose.msra.mxu0 0.0
        %536 = vmatprep.subr.mxu0 0.0
        %537 = vmatpush1.xpose.msra.mxu0 0.0
        %538 = vmatprep.subr.mxu0 0.0
        %539 = vmatpush1.xpose.msra.mxu0 0.0
        %540 = vmatprep.subr.mxu0 0.0
        %541 = vmatpush1.xpose.msra.mxu0 0.0
        %542 = vmatprep.subr.mxu0 0.0
        %543 = vmatpush1.xpose.msra.mxu0 0.0
        %544 = vmatprep.subr.mxu0 0.0
        %545 = vmatpush1.xpose.msra.mxu0 0.0
        %546 = vmatprep.subr.mxu0 0.0
        %547 = vmatpush1.xpose.msra.mxu0 0.0
        %548 = vmatprep.subr.mxu0 0.0
        %549 = vmatpush1.xpose.msra.mxu0 0.0
        %550 = vmatprep.subr.mxu0 0.0
        %551 = vmatpush1.xpose.msra.mxu0 0.0
        %552 = vmatprep.subr.mxu0 0.0
        %553 = vmatpush1.xpose.msra.mxu0 0.0
        %554 = vmatprep.subr.mxu0 0.0
        %555 = vmatpush1.xpose.msra.mxu0 0.0
        %556 = vmatprep.subr.mxu0 0.0
        %557 = vmatpush1.xpose.msra.mxu0 0.0
        %558 = vmatprep.subr.mxu0 0.0
        %559 = vmatpush1.xpose.msra.mxu0 %v526
        %560 = vmatprep.subr.mxu0 0.0
        %561 = vmatpush2.xpose.msra.mxu0 0.0
        %562 = vmatprep.subr.mxu0 0.0
        %563 = vmatpush2.xpose.msra.mxu0 0.0
        %564 = vmatprep.subr.mxu0 0.0
        %565 = vmatpush2.xpose.msra.mxu0 0.0
        %566 = vmatprep.subr.mxu0 0.0
        %567 = vmatpush2.xpose.msra.mxu0 0.0
        %568 = vmatprep.subr.mxu0 0.0
        %569 = vmatpush2.xpose.msra.mxu0 0.0
        %570 = vmatprep.subr.mxu0 0.0
        %571 = vmatpush2.xpose.msra.mxu0 0.0
        %572 = vmatprep.subr.mxu0 0.0
        %573 = vmatpush2.xpose.msra.mxu0 0.0
        %574 = vmatprep.subr.mxu0 0.0
        %575 = vmatpush2.xpose.msra.mxu0 0.0
        %576 = vmatprep.subr.mxu0 0.0
        %577 = vmatpush2.xpose.msra.mxu0 0.0
        %578 = vmatprep.subr.mxu0 0.0
        %579 = vmatpush2.xpose.msra.mxu0 0.0
        %580 = vmatprep.subr.mxu0 0.0
        %581 = vmatpush2.xpose.msra.mxu0 0.0
        %582 = vmatprep.subr.mxu0 0.0
        %583 = vmatpush2.xpose.msra.mxu0 0.0
        %584 = vmatprep.subr.mxu0 0.0
        %585 = vmatpush2.xpose.msra.mxu0 0.0
        %586 = vmatprep.subr.mxu0 0.0
        %587 = vmatpush2.xpose.msra.mxu0 0.0
        %588 = vmatprep.subr.mxu0 0.0
        %589 = vmatpush2.xpose.msra.mxu0 0.0
        %590 = vmatprep.subr.mxu0 0.0
        %591 = vmatpush2.xpose.msra.mxu0 0.0
        %592 = vmatprep.mubr.f32.mxu0 0.0
        %593 = vmatmul.mubr.f32.gmra.mxu0 %v524
        %v594 = vpop.f32.mrf.mxu0
        %v595 = vadd.f32 0.0, %v594
        %v596 = vpop.f32.mrf.mxu0
        %597 = vdwg.mxu0
        %v598 = vsel %vm522, %v595, -inf
        %599 = vmax.xlane.f32.xlu0 %v598
        %v600 = vpop.xlane.xlu0 %599
        %v601 = vsub.f32 %v595, %v600
        %v602 = vmul.f32 %v601, 1.442695
        %v603 = vpow.pop %v602
        %v604 = vsel %vm522, %v603, 0.0
        %605 = vadd.xlane.f32.xlu0 %v604
        %v606 = vpop.xlane.xlu0 %605
        %v607 = vrcp.pop %v606
        %v608 = vmul.f32 %v603, %v607
        %609 = vrot.lane.b32.xlu0 %v515, 64
        %v610 = vpop.permute.xlu0 %609
        %v613 = vsel %vm522, %v608, 0
        %615 = vmatprep.subr.mxu0 0.0
        %616 = vmatpush1.msra.mxu0 0.0
        %617 = vmatprep.subr.mxu0 0.0
        %618 = vmatpush1.msra.mxu0 0.0
        %619 = vmatprep.subr.mxu0 0.0
        %620 = vmatpush1.msra.mxu0 0.0
        %621 = vmatprep.subr.mxu0 0.0
        %622 = vmatpush1.msra.mxu0 0.0
        %623 = vmatprep.subr.mxu0 0.0
        %624 = vmatpush1.msra.mxu0 0.0
        %625 = vmatprep.subr.mxu0 0.0
        %626 = vmatpush1.msra.mxu0 0.0
        %627 = vmatprep.subr.mxu0 0.0
        %628 = vmatpush1.msra.mxu0 0.0
        %629 = vmatprep.subr.mxu0 0.0
        %630 = vmatpush1.msra.mxu0 0.0
        %631 = vmatprep.subr.mxu0 0.0
        %632 = vmatpush1.msra.mxu0 0.0
        %633 = vmatprep.subr.mxu0 0.0
        %634 = vmatpush1.msra.mxu0 0.0
        %635 = vmatprep.subr.mxu0 0.0
        %636 = vmatpush1.msra.mxu0 0.0
        %637 = vmatprep.subr.mxu0 0.0
        %638 = vmatpush1.msra.mxu0 0.0
        %639 = vmatprep.subr.mxu0 0.0
        %640 = vmatpush1.msra.mxu0 0.0
        %641 = vmatprep.subr.mxu0 0.0
        %642 = vmatpush1.msra.mxu0 0.0
        %643 = vmatprep.subr.mxu0 0.0
        %644 = vmatpush1.msra.mxu0 0.0
        %645 = vmatprep.subr.mxu0 0.0
        %646 = vmatpush1.msra.mxu0 %v610
        %647 = vmatprep.subr.mxu0 0.0
        %648 = vmatpush2.msra.mxu0 0.0
        %649 = vmatprep.subr.mxu0 0.0
        %650 = vmatpush2.msra.mxu0 0.0
        %651 = vmatprep.subr.mxu0 0.0
        %652 = vmatpush2.msra.mxu0 0.0
        %653 = vmatprep.subr.mxu0 0.0
        %654 = vmatpush2.msra.mxu0 0.0
        %655 = vmatprep.subr.mxu0 0.0
        %656 = vmatpush2.msra.mxu0 0.0
        %657 = vmatprep.subr.mxu0 0.0
        %658 = vmatpush2.msra.mxu0 0.0
        %659 = vmatprep.subr.mxu0 0.0
        %660 = vmatpush2.msra.mxu0 0.0
        %661 = vmatprep.subr.mxu0 0.0
        %662 = vmatpush2.msra.mxu0 0.0
        %663 = vmatprep.subr.mxu0 0.0
        %664 = vmatpush2.msra.mxu0 0.0
        %665 = vmatprep.subr.mxu0 0.0
        %666 = vmatpush2.msra.mxu0 0.0
        %667 = vmatprep.subr.mxu0 0.0
        %668 = vmatpush2.msra.mxu0 0.0
        %669 = vmatprep.subr.mxu0 0.0
        %670 = vmatpush2.msra.mxu0 0.0
        %671 = vmatprep.subr.mxu0 0.0
        %672 = vmatpush2.msra.mxu0 0.0
        %673 = vmatprep.subr.mxu0 0.0
        %674 = vmatpush2.msra.mxu0 0.0
        %675 = vmatprep.subr.mxu0 0.0
        %676 = vmatpush2.msra.mxu0 0.0
        %677 = vmatprep.subr.mxu0 0.0
        %678 = vmatpush2.msra.mxu0 0.0
        %679 = vmatprep.mubr.f32.mxu0 0.0
        %680 = vmatmul.mubr.f32.gmra.mxu0 %v613
        %v681 = vpop.f32.mrf.mxu0
        %v682 = vadd.f32 0.0, %v681
        %v683 = vpop.f32.mrf.mxu0
        %684 = vdwg.mxu0
        %v685 = vld [vmem:[%s4] sm:$0xff]
        %686 = vrot.lane.b32.xlu0 %v518, 120
        %v687 = vpop.permute.xlu0 %686
        %688 = vrot.lane.b32.xlu0 %v515, 88
        %v689 = vpop.permute.xlu0 %688
        %v690 = vsel %vm522, %v687, 0
        %v692 = vsel %vm522, %v689, 0
        %694 = vmatprep.subr.mxu0 0.0
        %695 = vmatpush1.xpose.msra.mxu0 0.0
        %696 = vmatprep.subr.mxu0 0.0
        %697 = vmatpush1.xpose.msra.mxu0 0.0
        %698 = vmatprep.subr.mxu0 0.0
        %699 = vmatpush1.xpose.msra.mxu0 0.0
        %700 = vmatprep.subr.mxu0 0.0
        %701 = vmatpush1.xpose.msra.mxu0 0.0
        %702 = vmatprep.subr.mxu0 0.0
        %703 = vmatpush1.xpose.msra.mxu0 0.0
        %704 = vmatprep.subr.mxu0 0.0
        %705 = vmatpush1.xpose.msra.mxu0 0.0
        %706 = vmatprep.subr.mxu0 0.0
        %707 = vmatpush1.xpose.msra.mxu0 0.0
        %708 = vmatprep.subr.mxu0 0.0
        %709 = vmatpush1.xpose.msra.mxu0 0.0
        %710 = vmatprep.subr.mxu0 0.0
        %711 = vmatpush1.xpose.msra.mxu0 0.0
        %712 = vmatprep.subr.mxu0 0.0
        %713 = vmatpush1.xpose.msra.mxu0 0.0
        %714 = vmatprep.subr.mxu0 0.0
        %715 = vmatpush1.xpose.msra.mxu0 0.0
        %716 = vmatprep.subr.mxu0 0.0
        %717 = vmatpush1.xpose.msra.mxu0 0.0
        %718 = vmatprep.subr.mxu0 0.0
        %719 = vmatpush1.xpose.msra.mxu0 0.0
        %720 = vmatprep.subr.mxu0 0.0
        %721 = vmatpush1.xpose.msra.mxu0 0.0
        %722 = vmatprep.subr.mxu0 0.0
        %723 = vmatpush1.xpose.msra.mxu0 0.0
        %724 = vmatprep.subr.mxu0 0.0
        %725 = vmatpush1.xpose.msra.mxu0 %v692
        %726 = vmatprep.subr.mxu0 0.0
        %727 = vmatpush2.xpose.msra.mxu0 0.0
        %728 = vmatprep.subr.mxu0 0.0
        %729 = vmatpush2.xpose.msra.mxu0 0.0
        %730 = vmatprep.subr.mxu0 0.0
        %731 = vmatpush2.xpose.msra.mxu0 0.0
        %732 = vmatprep.subr.mxu0 0.0
        %733 = vmatpush2.xpose.msra.mxu0 0.0
        %734 = vmatprep.subr.mxu0 0.0
        %735 = vmatpush2.xpose.msra.mxu0 0.0
        %736 = vmatprep.subr.mxu0 0.0
        %737 = vmatpush2.xpose.msra.mxu0 0.0
        %738 = vmatprep.subr.mxu0 0.0
        %739 = vmatpush2.xpose.msra.mxu0 0.0
        %740 = vmatprep.subr.mxu0 0.0
        %741 = vmatpush2.xpose.msra.mxu0 0.0
        %742 = vmatprep.subr.mxu0 0.0
        %743 = vmatpush2.xpose.msra.mxu0 0.0
        %744 = vmatprep.subr.mxu0 0.0
        %745 = vmatpush2.xpose.msra.mxu0 0.0
        %746 = vmatprep.subr.mxu0 0.0
        %747 = vmatpush2.xpose.msra.mxu0 0.0
        %748 = vmatprep.subr.mxu0 0.0
        %749 = vmatpush2.xpose.msra.mxu0 0.0
        %750 = vmatprep.subr.mxu0 0.0
        %751 = vmatpush2.xpose.msra.mxu0 0.0
        %752 = vmatprep.subr.mxu0 0.0
        %753 = vmatpush2.xpose.msra.mxu0 0.0
        %754 = vmatprep.subr.mxu0 0.0
        %755 = vmatpush2.xpose.msra.mxu0 0.0
        %756 = vmatprep.subr.mxu0 0.0
        %757 = vmatpush2.xpose.msra.mxu0 0.0
        %758 = vmatprep.mubr.f32.mxu0 0.0
        %759 = vmatmul.mubr.f32.gmra.mxu0 %v690
        %v760 = vpop.f32.mrf.mxu0
        %v761 = vadd.f32 0.0, %v760
        %v762 = vpop.f32.mrf.mxu0
        %763 = vdwg.mxu0
        %v764 = vsel %vm522, %v761, -inf
        %765 = vmax.xlane.f32.xlu0 %v764
        %v766 = vpop.xlane.xlu0 %765
        %v767 = vsub.f32 %v761, %v766
        %v768 = vmul.f32 %v767, 1.442695
        %v769 = vpow.pop %v768
        %v770 = vsel %vm522, %v769, 0.0
        %771 = vadd.xlane.f32.xlu0 %v770
        %v772 = vpop.xlane.xlu0 %771
        %v773 = vrcp.pop %v772
        %v774 = vmul.f32 %v769, %v773
        %775 = vrot.lane.b32.xlu0 %v515, 56
        %v776 = vpop.permute.xlu0 %775
        %v779 = vsel %vm522, %v774, 0
        %781 = vmatprep.subr.mxu0 0.0
        %782 = vmatpush1.msra.mxu0 0.0
        %783 = vmatprep.subr.mxu0 0.0
        %784 = vmatpush1.msra.mxu0 0.0
        %785 = vmatprep.subr.mxu0 0.0
        %786 = vmatpush1.msra.mxu0 0.0
        %787 = vmatprep.subr.mxu0 0.0
        %788 = vmatpush1.msra.mxu0 0.0
        %789 = vmatprep.subr.mxu0 0.0
        %790 = vmatpush1.msra.mxu0 0.0
        %791 = vmatprep.subr.mxu0 0.0
        %792 = vmatpush1.msra.mxu0 0.0
        %793 = vmatprep.subr.mxu0 0.0
        %794 = vmatpush1.msra.mxu0 0.0
        %795 = vmatprep.subr.mxu0 0.0
        %796 = vmatpush1.msra.mxu0 0.0
        %797 = vmatprep.subr.mxu0 0.0
        %798 = vmatpush1.msra.mxu0 0.0
        %799 = vmatprep.subr.mxu0 0.0
        %800 = vmatpush1.msra.mxu0 0.0
        %801 = vmatprep.subr.mxu0 0.0
        %802 = vmatpush1.msra.mxu0 0.0
        %803 = vmatprep.subr.mxu0 0.0
        %804 = vmatpush1.msra.mxu0 0.0
        %805 = vmatprep.subr.mxu0 0.0
        %806 = vmatpush1.msra.mxu0 0.0
        %807 = vmatprep.subr.mxu0 0.0
        %808 = vmatpush1.msra.mxu0 0.0
        %809 = vmatprep.subr.mxu0 0.0
        %810 = vmatpush1.msra.mxu0 0.0
        %811 = vmatprep.subr.mxu0 0.0
        %812 = vmatpush1.msra.mxu0 %v776
        %813 = vmatprep.subr.mxu0 0.0
        %814 = vmatpush2.msra.mxu0 0.0
        %815 = vmatprep.subr.mxu0 0.0
        %816 = vmatpush2.msra.mxu0 0.0
        %817 = vmatprep.subr.mxu0 0.0
        %818 = vmatpush2.msra.mxu0 0.0
        %819 = vmatprep.subr.mxu0 0.0
        %820 = vmatpush2.msra.mxu0 0.0
        %821 = vmatprep.subr.mxu0 0.0
        %822 = vmatpush2.msra.mxu0 0.0
        %823 = vmatprep.subr.mxu0 0.0
        %824 = vmatpush2.msra.mxu0 0.0
        %825 = vmatprep.subr.mxu0 0.0
        %826 = vmatpush2.msra.mxu0 0.0
        %827 = vmatprep.subr.mxu0 0.0
        %828 = vmatpush2.msra.mxu0 0.0
        %829 = vmatprep.subr.mxu0 0.0
        %830 = vmatpush2.msra.mxu0 0.0
        %831 = vmatprep.subr.mxu0 0.0
        %832 = vmatpush2.msra.mxu0 0.0
        %833 = vmatprep.subr.mxu0 0.0
        %834 = vmatpush2.msra.mxu0 0.0
        %835 = vmatprep.subr.mxu0 0.0
        %836 = vmatpush2.msra.mxu0 0.0
        %837 = vmatprep.subr.mxu0 0.0
        %838 = vmatpush2.msra.mxu0 0.0
        %839 = vmatprep.subr.mxu0 0.0
        %840 = vmatpush2.msra.mxu0 0.0
        %841 = vmatprep.subr.mxu0 0.0
        %842 = vmatpush2.msra.mxu0 0.0
        %843 = vmatprep.subr.mxu0 0.0
        %844 = vmatpush2.msra.mxu0 0.0
        %845 = vmatprep.mubr.f32.mxu0 0.0
        %846 = vmatmul.mubr.f32.gmra.mxu0 %v779
        %v847 = vpop.f32.mrf.mxu0
        %v848 = vadd.f32 0.0, %v847
        %v849 = vpop.f32.mrf.mxu0
        %850 = vdwg.mxu0
        %v851 = vld [vmem:[%s4 + $0x8] sm:$0xff]
        %v853 = vsel %vm522, %v848, 0
        %855 = vmatprep.subr.mxu0 0.0
        %856 = vmatpush1.msra.mxu0 0.0
        %857 = vmatprep.subr.mxu0 0.0
        %858 = vmatpush1.msra.mxu0 0.0
        %859 = vmatprep.subr.mxu0 0.0
        %860 = vmatpush1.msra.mxu0 0.0
        %861 = vmatprep.subr.mxu0 0.0
        %862 = vmatpush1.msra.mxu0 0.0
        %863 = vmatprep.subr.mxu0 0.0
        %864 = vmatpush1.msra.mxu0 0.0
        %865 = vmatprep.subr.mxu0 0.0
        %866 = vmatpush1.msra.mxu0 0.0
        %867 = vmatprep.subr.mxu0 0.0
        %868 = vmatpush1.msra.mxu0 0.0
        %869 = vmatprep.subr.mxu0 0.0
        %870 = vmatpush1.msra.mxu0 0.0
        %871 = vmatprep.subr.mxu0 0.0
        %872 = vmatpush1.msra.mxu0 0.0
        %873 = vmatprep.subr.mxu0 0.0
        %874 = vmatpush1.msra.mxu0 0.0
        %875 = vmatprep.subr.mxu0 0.0
        %876 = vmatpush1.msra.mxu0 0.0
        %877 = vmatprep.subr.mxu0 0.0
        %878 = vmatpush1.msra.mxu0 0.0
        %879 = vmatprep.subr.mxu0 0.0
        %880 = vmatpush1.msra.mxu0 0.0
        %881 = vmatprep.subr.mxu0 0.0
        %882 = vmatpush1.msra.mxu0 0.0
        %883 = vmatprep.subr.mxu0 0.0
        %884 = vmatpush1.msra.mxu0 0.0
        %885 = vmatprep.subr.mxu0 0.0
        %886 = vmatpush1.msra.mxu0 %v851
        %887 = vmatprep.subr.mxu0 0.0
        %888 = vmatpush2.msra.mxu0 0.0
        %889 = vmatprep.subr.mxu0 0.0
        %890 = vmatpush2.msra.mxu0 0.0
        %891 = vmatprep.subr.mxu0 0.0
        %892 = vmatpush2.msra.mxu0 0.0
        %893 = vmatprep.subr.mxu0 0.0
        %894 = vmatpush2.msra.mxu0 0.0
        %895 = vmatprep.subr.mxu0 0.0
        %896 = vmatpush2.msra.mxu0 0.0
        %897 = vmatprep.subr.mxu0 0.0
        %898 = vmatpush2.msra.mxu0 0.0
        %899 = vmatprep.subr.mxu0 0.0
        %900 = vmatpush2.msra.mxu0 0.0
        %901 = vmatprep.subr.mxu0 0.0
        %902 = vmatpush2.msra.mxu0 0.0
        %903 = vmatprep.subr.mxu0 0.0
        %904 = vmatpush2.msra.mxu0 0.0
        %905 = vmatprep.subr.mxu0 0.0
        %906 = vmatpush2.msra.mxu0 0.0
        %907 = vmatprep.subr.mxu0 0.0
        %908 = vmatpush2.msra.mxu0 0.0
        %909 = vmatprep.subr.mxu0 0.0
        %910 = vmatpush2.msra.mxu0 0.0
        %911 = vmatprep.subr.mxu0 0.0
        %912 = vmatpush2.msra.mxu0 0.0
        %913 = vmatprep.subr.mxu0 0.0
        %914 = vmatpush2.msra.mxu0 0.0
        %915 = vmatprep.subr.mxu0 0.0
        %916 = vmatpush2.msra.mxu0 0.0
        %917 = vmatprep.subr.mxu0 0.0
        %918 = vmatpush2.msra.mxu0 0.0
        %919 = vmatprep.mubr.f32.mxu0 0.0
        %920 = vmatmul.mubr.f32.gmra.mxu0 %v853
        %v921 = vpop.f32.mrf.mxu0
        %v922 = vadd.f32 0.0, %v921
        %v923 = vpop.f32.mrf.mxu0
        %924 = vdwg.mxu0
        %v926 = vsel %vm522, %v682, 0
        %928 = vmatprep.subr.mxu0 0.0
        %929 = vmatpush1.msra.mxu0 0.0
        %930 = vmatprep.subr.mxu0 0.0
        %931 = vmatpush1.msra.mxu0 0.0
        %932 = vmatprep.subr.mxu0 0.0
        %933 = vmatpush1.msra.mxu0 0.0
        %934 = vmatprep.subr.mxu0 0.0
        %935 = vmatpush1.msra.mxu0 0.0
        %936 = vmatprep.subr.mxu0 0.0
        %937 = vmatpush1.msra.mxu0 0.0
        %938 = vmatprep.subr.mxu0 0.0
        %939 = vmatpush1.msra.mxu0 0.0
        %940 = vmatprep.subr.mxu0 0.0
        %941 = vmatpush1.msra.mxu0 0.0
        %942 = vmatprep.subr.mxu0 0.0
        %943 = vmatpush1.msra.mxu0 0.0
        %944 = vmatprep.subr.mxu0 0.0
        %945 = vmatpush1.msra.mxu0 0.0
        %946 = vmatprep.subr.mxu0 0.0
        %947 = vmatpush1.msra.mxu0 0.0
        %948 = vmatprep.subr.mxu0 0.0
        %949 = vmatpush1.msra.mxu0 0.0
        %950 = vmatprep.subr.mxu0 0.0
        %951 = vmatpush1.msra.mxu0 0.0
        %952 = vmatprep.subr.mxu0 0.0
        %953 = vmatpush1.msra.mxu0 0.0
        %954 = vmatprep.subr.mxu0 0.0
        %955 = vmatpush1.msra.mxu0 0.0
        %956 = vmatprep.subr.mxu0 0.0
        %957 = vmatpush1.msra.mxu0 0.0
        %958 = vmatprep.subr.mxu0 0.0
        %959 = vmatpush1.msra.mxu0 %v685
        %960 = vmatprep.subr.mxu0 0.0
        %961 = vmatpush2.msra.mxu0 0.0
        %962 = vmatprep.subr.mxu0 0.0
        %963 = vmatpush2.msra.mxu0 0.0
        %964 = vmatprep.subr.mxu0 0.0
        %965 = vmatpush2.msra.mxu0 0.0
        %966 = vmatprep.subr.mxu0 0.0
        %967 = vmatpush2.msra.mxu0 0.0
        %968 = vmatprep.subr.mxu0 0.0
        %969 = vmatpush2.msra.mxu0 0.0
        %970 = vmatprep.subr.mxu0 0.0
        %971 = vmatpush2.msra.mxu0 0.0
        %972 = vmatprep.subr.mxu0 0.0
        %973 = vmatpush2.msra.mxu0 0.0
        %974 = vmatprep.subr.mxu0 0.0
        %975 = vmatpush2.msra.mxu0 0.0
        %976 = vmatprep.subr.mxu0 0.0
        %977 = vmatpush2.msra.mxu0 0.0
        %978 = vmatprep.subr.mxu0 0.0
        %979 = vmatpush2.msra.mxu0 0.0
        %980 = vmatprep.subr.mxu0 0.0
        %981 = vmatpush2.msra.mxu0 0.0
        %982 = vmatprep.subr.mxu0 0.0
        %983 = vmatpush2.msra.mxu0 0.0
        %984 = vmatprep.subr.mxu0 0.0
        %985 = vmatpush2.msra.mxu0 0.0
        %986 = vmatprep.subr.mxu0 0.0
        %987 = vmatpush2.msra.mxu0 0.0
        %988 = vmatprep.subr.mxu0 0.0
        %989 = vmatpush2.msra.mxu0 0.0
        %990 = vmatprep.subr.mxu0 0.0
        %991 = vmatpush2.msra.mxu0 0.0
        %992 = vmatprep.mubr.f32.mxu0 0.0
        %993 = vmatmul.mubr.f32.gmra.mxu0 %v926
        %v994 = vpop.f32.mrf.mxu0
        %v995 = vadd.f32 %v922, %v994
        %v996 = vpop.f32.mrf.mxu0
        %997 = vdwg.mxu0
        %998 = vrot.lane.b32.xlu0 %v518, 112
        %v999 = vpop.permute.xlu0 %998
        %1000 = vrot.lane.b32.xlu0 %v515, 80
        %v1001 = vpop.permute.xlu0 %1000
        %v1002 = vsel %vm522, %v999, 0
        %v1004 = vsel %vm522, %v1001, 0
        %1006 = vmatprep.subr.mxu0 0.0
        %1007 = vmatpush1.xpose.msra.mxu0 0.0
        %1008 = vmatprep.subr.mxu0 0.0
        %1009 = vmatpush1.xpose.msra.mxu0 0.0
        %1010 = vmatprep.subr.mxu0 0.0
        %1011 = vmatpush1.xpose.msra.mxu0 0.0
        %1012 = vmatprep.subr.mxu0 0.0
        %1013 = vmatpush1.xpose.msra.mxu0 0.0
        %1014 = vmatprep.subr.mxu0 0.0
        %1015 = vmatpush1.xpose.msra.mxu0 0.0
        %1016 = vmatprep.subr.mxu0 0.0
        %1017 = vmatpush1.xpose.msra.mxu0 0.0
        %1018 = vmatprep.subr.mxu0 0.0
        %1019 = vmatpush1.xpose.msra.mxu0 0.0
        %1020 = vmatprep.subr.mxu0 0.0
        %1021 = vmatpush1.xpose.msra.mxu0 0.0
        %1022 = vmatprep.subr.mxu0 0.0
        %1023 = vmatpush1.xpose.msra.mxu0 0.0
        %1024 = vmatprep.subr.mxu0 0.0
        %1025 = vmatpush1.xpose.msra.mxu0 0.0
        %1026 = vmatprep.subr.mxu0 0.0
        %1027 = vmatpush1.xpose.msra.mxu0 0.0
        %1028 = vmatprep.subr.mxu0 0.0
        %1029 = vmatpush1.xpose.msra.mxu0 0.0
        %1030 = vmatprep.subr.mxu0 0.0
        %1031 = vmatpush1.xpose.msra.mxu0 0.0
        %1032 = vmatprep.subr.mxu0 0.0
        %1033 = vmatpush1.xpose.msra.mxu0 0.0
        %1034 = vmatprep.subr.mxu0 0.0
        %1035 = vmatpush1.xpose.msra.mxu0 0.0
        %1036 = vmatprep.subr.mxu0 0.0
        %1037 = vmatpush1.xpose.msra.mxu0 %v1004
        %1038 = vmatprep.subr.mxu0 0.0
        %1039 = vmatpush2.xpose.msra.mxu0 0.0
        %1040 = vmatprep.subr.mxu0 0.0
        %1041 = vmatpush2.xpose.msra.mxu0 0.0
        %1042 = vmatprep.subr.mxu0 0.0
        %1043 = vmatpush2.xpose.msra.mxu0 0.0
        %1044 = vmatprep.subr.mxu0 0.0
        %1045 = vmatpush2.xpose.msra.mxu0 0.0
        %1046 = vmatprep.subr.mxu0 0.0
        %1047 = vmatpush2.xpose.msra.mxu0 0.0
        %1048 = vmatprep.subr.mxu0 0.0
        %1049 = vmatpush2.xpose.msra.mxu0 0.0
        %1050 = vmatprep.subr.mxu0 0.0
        %1051 = vmatpush2.xpose.msra.mxu0 0.0
        %1052 = vmatprep.subr.mxu0 0.0
        %1053 = vmatpush2.xpose.msra.mxu0 0.0
        %1054 = vmatprep.subr.mxu0 0.0
        %1055 = vmatpush2.xpose.msra.mxu0 0.0
        %1056 = vmatprep.subr.mxu0 0.0
        %1057 = vmatpush2.xpose.msra.mxu0 0.0
        %1058 = vmatprep.subr.mxu0 0.0
        %1059 = vmatpush2.xpose.msra.mxu0 0.0
        %1060 = vmatprep.subr.mxu0 0.0
        %1061 = vmatpush2.xpose.msra.mxu0 0.0
        %1062 = vmatprep.subr.mxu0 0.0
        %1063 = vmatpush2.xpose.msra.mxu0 0.0
        %1064 = vmatprep.subr.mxu0 0.0
        %1065 = vmatpush2.xpose.msra.mxu0 0.0
        %1066 = vmatprep.subr.mxu0 0.0
        %1067 = vmatpush2.xpose.msra.mxu0 0.0
        %1068 = vmatprep.subr.mxu0 0.0
        %1069 = vmatpush2.xpose.msra.mxu0 0.0
        %1070 = vmatprep.mubr.f32.mxu0 0.0
        %1071 = vmatmul.mubr.f32.gmra.mxu0 %v1002
        %v1072 = vpop.f32.mrf.mxu0
        %v1073 = vadd.f32 0.0, %v1072
        %v1074 = vpop.f32.mrf.mxu0
        %1075 = vdwg.mxu0
        %v1076 = vsel %vm522, %v1073, -inf
        %1077 = vmax.xlane.f32.xlu0 %v1076
        %v1078 = vpop.xlane.xlu0 %1077
        %v1079 = vsub.f32 %v1073, %v1078
        %v1080 = vmul.f32 %v1079, 1.442695
        %v1081 = vpow.pop %v1080
        %v1082 = vsel %vm522, %v1081, 0.0
        %1083 = vadd.xlane.f32.xlu0 %v1082
        %v1084 = vpop.xlane.xlu0 %1083
        %v1085 = vrcp.pop %v1084
        %v1086 = vmul.f32 %v1081, %v1085
        %1087 = vrot.lane.b32.xlu0 %v515, 48
        %v1088 = vpop.permute.xlu0 %1087
        %v1091 = vsel %vm522, %v1086, 0
        %1093 = vmatprep.subr.mxu0 0.0
        %1094 = vmatpush1.msra.mxu0 0.0
        %1095 = vmatprep.subr.mxu0 0.0
        %1096 = vmatpush1.msra.mxu0 0.0
        %1097 = vmatprep.subr.mxu0 0.0
        %1098 = vmatpush1.msra.mxu0 0.0
        %1099 = vmatprep.subr.mxu0 0.0
        %1100 = vmatpush1.msra.mxu0 0.0
        %1101 = vmatprep.subr.mxu0 0.0
        %1102 = vmatpush1.msra.mxu0 0.0
        %1103 = vmatprep.subr.mxu0 0.0
        %1104 = vmatpush1.msra.mxu0 0.0
        %1105 = vmatprep.subr.mxu0 0.0
        %1106 = vmatpush1.msra.mxu0 0.0
        %1107 = vmatprep.subr.mxu0 0.0
        %1108 = vmatpush1.msra.mxu0 0.0
        %1109 = vmatprep.subr.mxu0 0.0
        %1110 = vmatpush1.msra.mxu0 0.0
        %1111 = vmatprep.subr.mxu0 0.0
        %1112 = vmatpush1.msra.mxu0 0.0
        %1113 = vmatprep.subr.mxu0 0.0
        %1114 = vmatpush1.msra.mxu0 0.0
        %1115 = vmatprep.subr.mxu0 0.0
        %1116 = vmatpush1.msra.mxu0 0.0
        %1117 = vmatprep.subr.mxu0 0.0
        %1118 = vmatpush1.msra.mxu0 0.0
        %1119 = vmatprep.subr.mxu0 0.0
        %1120 = vmatpush1.msra.mxu0 0.0
        %1121 = vmatprep.subr.mxu0 0.0
        %1122 = vmatpush1.msra.mxu0 0.0
        %1123 = vmatprep.subr.mxu0 0.0
        %1124 = vmatpush1.msra.mxu0 %v1088
        %1125 = vmatprep.subr.mxu0 0.0
        %1126 = vmatpush2.msra.mxu0 0.0
        %1127 = vmatprep.subr.mxu0 0.0
        %1128 = vmatpush2.msra.mxu0 0.0
        %1129 = vmatprep.subr.mxu0 0.0
        %1130 = vmatpush2.msra.mxu0 0.0
        %1131 = vmatprep.subr.mxu0 0.0
        %1132 = vmatpush2.msra.mxu0 0.0
        %1133 = vmatprep.subr.mxu0 0.0
        %1134 = vmatpush2.msra.mxu0 0.0
        %1135 = vmatprep.subr.mxu0 0.0
        %1136 = vmatpush2.msra.mxu0 0.0
        %1137 = vmatprep.subr.mxu0 0.0
        %1138 = vmatpush2.msra.mxu0 0.0
        %1139 = vmatprep.subr.mxu0 0.0
        %1140 = vmatpush2.msra.mxu0 0.0
        %1141 = vmatprep.subr.mxu0 0.0
        %1142 = vmatpush2.msra.mxu0 0.0
        %1143 = vmatprep.subr.mxu0 0.0
        %1144 = vmatpush2.msra.mxu0 0.0
        %1145 = vmatprep.subr.mxu0 0.0
        %1146 = vmatpush2.msra.mxu0 0.0
        %1147 = vmatprep.subr.mxu0 0.0
        %1148 = vmatpush2.msra.mxu0 0.0
        %1149 = vmatprep.subr.mxu0 0.0
        %1150 = vmatpush2.msra.mxu0 0.0
        %1151 = vmatprep.subr.mxu0 0.0
        %1152 = vmatpush2.msra.mxu0 0.0
        %1153 = vmatprep.subr.mxu0 0.0
        %1154 = vmatpush2.msra.mxu0 0.0
        %1155 = vmatprep.subr.mxu0 0.0
        %1156 = vmatpush2.msra.mxu0 0.0
        %1157 = vmatprep.mubr.f32.mxu0 0.0
        %1158 = vmatmul.mubr.f32.gmra.mxu0 %v1091
        %v1159 = vpop.f32.mrf.mxu0
        %v1160 = vadd.f32 0.0, %v1159
        %v1161 = vpop.f32.mrf.mxu0
        %1162 = vdwg.mxu0
        %v1163 = vld [vmem:[%s4 + $0x10] sm:$0xff]
        %v1165 = vsel %vm522, %v1160, 0
        %1167 = vmatprep.subr.mxu0 0.0
        %1168 = vmatpush1.msra.mxu0 0.0
        %1169 = vmatprep.subr.mxu0 0.0
        %1170 = vmatpush1.msra.mxu0 0.0
        %1171 = vmatprep.subr.mxu0 0.0
        %1172 = vmatpush1.msra.mxu0 0.0
        %1173 = vmatprep.subr.mxu0 0.0
        %1174 = vmatpush1.msra.mxu0 0.0
        %1175 = vmatprep.subr.mxu0 0.0
        %1176 = vmatpush1.msra.mxu0 0.0
        %1177 = vmatprep.subr.mxu0 0.0
        %1178 = vmatpush1.msra.mxu0 0.0
        %1179 = vmatprep.subr.mxu0 0.0
        %1180 = vmatpush1.msra.mxu0 0.0
        %1181 = vmatprep.subr.mxu0 0.0
        %1182 = vmatpush1.msra.mxu0 0.0
        %1183 = vmatprep.subr.mxu0 0.0
        %1184 = vmatpush1.msra.mxu0 0.0
        %1185 = vmatprep.subr.mxu0 0.0
        %1186 = vmatpush1.msra.mxu0 0.0
        %1187 = vmatprep.subr.mxu0 0.0
        %1188 = vmatpush1.msra.mxu0 0.0
        %1189 = vmatprep.subr.mxu0 0.0
        %1190 = vmatpush1.msra.mxu0 0.0
        %1191 = vmatprep.subr.mxu0 0.0
        %1192 = vmatpush1.msra.mxu0 0.0
        %1193 = vmatprep.subr.mxu0 0.0
        %1194 = vmatpush1.msra.mxu0 0.0
        %1195 = vmatprep.subr.mxu0 0.0
        %1196 = vmatpush1.msra.mxu0 0.0
        %1197 = vmatprep.subr.mxu0 0.0
        %1198 = vmatpush1.msra.mxu0 %v1163
        %1199 = vmatprep.subr.mxu0 0.0
        %1200 = vmatpush2.msra.mxu0 0.0
        %1201 = vmatprep.subr.mxu0 0.0
        %1202 = vmatpush2.msra.mxu0 0.0
        %1203 = vmatprep.subr.mxu0 0.0
        %1204 = vmatpush2.msra.mxu0 0.0
        %1205 = vmatprep.subr.mxu0 0.0
        %1206 = vmatpush2.msra.mxu0 0.0
        %1207 = vmatprep.subr.mxu0 0.0
        %1208 = vmatpush2.msra.mxu0 0.0
        %1209 = vmatprep.subr.mxu0 0.0
        %1210 = vmatpush2.msra.mxu0 0.0
        %1211 = vmatprep.subr.mxu0 0.0
        %1212 = vmatpush2.msra.mxu0 0.0
        %1213 = vmatprep.subr.mxu0 0.0
        %1214 = vmatpush2.msra.mxu0 0.0
        %1215 = vmatprep.subr.mxu0 0.0
        %1216 = vmatpush2.msra.mxu0 0.0
        %1217 = vmatprep.subr.mxu0 0.0
        %1218 = vmatpush2.msra.mxu0 0.0
        %1219 = vmatprep.subr.mxu0 0.0
        %1220 = vmatpush2.msra.mxu0 0.0
        %1221 = vmatprep.subr.mxu0 0.0
        %1222 = vmatpush2.msra.mxu0 0.0
        %1223 = vmatprep.subr.mxu0 0.0
        %1224 = vmatpush2.msra.mxu0 0.0
        %1225 = vmatprep.subr.mxu0 0.0
        %1226 = vmatpush2.msra.mxu0 0.0
        %1227 = vmatprep.subr.mxu0 0.0
        %1228 = vmatpush2.msra.mxu0 0.0
        %1229 = vmatprep.subr.mxu0 0.0
        %1230 = vmatpush2.msra.mxu0 0.0
        %1231 = vmatprep.mubr.f32.mxu0 0.0
        %1232 = vmatmul.mubr.f32.gmra.mxu0 %v1165
        %v1233 = vpop.f32.mrf.mxu0
        %v1234 = vadd.f32 0.0, %v1233
        %v1235 = vpop.f32.mrf.mxu0
        %1236 = vdwg.mxu0
        %v1237 = vadd.f32 %v995, %v1234
        %1238 = vrot.lane.b32.xlu0 %v518, 104
        %v1239 = vpop.permute.xlu0 %1238
        %1240 = vrot.lane.b32.xlu0 %v515, 72
        %v1241 = vpop.permute.xlu0 %1240
        %v1242 = vsel %vm522, %v1239, 0
        %v1244 = vsel %vm522, %v1241, 0
        %1246 = vmatprep.subr.mxu0 0.0
        %1247 = vmatpush1.xpose.msra.mxu0 0.0
        %1248 = vmatprep.subr.mxu0 0.0
        %1249 = vmatpush1.xpose.msra.mxu0 0.0
        %1250 = vmatprep.subr.mxu0 0.0
        %1251 = vmatpush1.xpose.msra.mxu0 0.0
        %1252 = vmatprep.subr.mxu0 0.0
        %1253 = vmatpush1.xpose.msra.mxu0 0.0
        %1254 = vmatprep.subr.mxu0 0.0
        %1255 = vmatpush1.xpose.msra.mxu0 0.0
        %1256 = vmatprep.subr.mxu0 0.0
        %1257 = vmatpush1.xpose.msra.mxu0 0.0
        %1258 = vmatprep.subr.mxu0 0.0
        %1259 = vmatpush1.xpose.msra.mxu0 0.0
        %1260 = vmatprep.subr.mxu0 0.0
        %1261 = vmatpush1.xpose.msra.mxu0 0.0
        %1262 = vmatprep.subr.mxu0 0.0
        %1263 = vmatpush1.xpose.msra.mxu0 0.0
        %1264 = vmatprep.subr.mxu0 0.0
        %1265 = vmatpush1.xpose.msra.mxu0 0.0
        %1266 = vmatprep.subr.mxu0 0.0
        %1267 = vmatpush1.xpose.msra.mxu0 0.0
        %1268 = vmatprep.subr.mxu0 0.0
        %1269 = vmatpush1.xpose.msra.mxu0 0.0
        %1270 = vmatprep.subr.mxu0 0.0
        %1271 = vmatpush1.xpose.msra.mxu0 0.0
        %1272 = vmatprep.subr.mxu0 0.0
        %1273 = vmatpush1.xpose.msra.mxu0 0.0
        %1274 = vmatprep.subr.mxu0 0.0
        %1275 = vmatpush1.xpose.msra.mxu0 0.0
        %1276 = vmatprep.subr.mxu0 0.0
        %1277 = vmatpush1.xpose.msra.mxu0 %v1244
        %1278 = vmatprep.subr.mxu0 0.0
        %1279 = vmatpush2.xpose.msra.mxu0 0.0
        %1280 = vmatprep.subr.mxu0 0.0
        %1281 = vmatpush2.xpose.msra.mxu0 0.0
        %1282 = vmatprep.subr.mxu0 0.0
        %1283 = vmatpush2.xpose.msra.mxu0 0.0
        %1284 = vmatprep.subr.mxu0 0.0
        %1285 = vmatpush2.xpose.msra.mxu0 0.0
        %1286 = vmatprep.subr.mxu0 0.0
        %1287 = vmatpush2.xpose.msra.mxu0 0.0
        %1288 = vmatprep.subr.mxu0 0.0
        %1289 = vmatpush2.xpose.msra.mxu0 0.0
        %1290 = vmatprep.subr.mxu0 0.0
        %1291 = vmatpush2.xpose.msra.mxu0 0.0
        %1292 = vmatprep.subr.mxu0 0.0
        %1293 = vmatpush2.xpose.msra.mxu0 0.0
        %1294 = vmatprep.subr.mxu0 0.0
        %1295 = vmatpush2.xpose.msra.mxu0 0.0
        %1296 = vmatprep.subr.mxu0 0.0
        %1297 = vmatpush2.xpose.msra.mxu0 0.0
        %1298 = vmatprep.subr.mxu0 0.0
        %1299 = vmatpush2.xpose.msra.mxu0 0.0
        %1300 = vmatprep.subr.mxu0 0.0
        %1301 = vmatpush2.xpose.msra.mxu0 0.0
        %1302 = vmatprep.subr.mxu0 0.0
        %1303 = vmatpush2.xpose.msra.mxu0 0.0
        %1304 = vmatprep.subr.mxu0 0.0
        %1305 = vmatpush2.xpose.msra.mxu0 0.0
        %1306 = vmatprep.subr.mxu0 0.0
        %1307 = vmatpush2.xpose.msra.mxu0 0.0
        %1308 = vmatprep.subr.mxu0 0.0
        %1309 = vmatpush2.xpose.msra.mxu0 0.0
        %1310 = vmatprep.mubr.f32.mxu0 0.0
        %1311 = vmatmul.mubr.f32.gmra.mxu0 %v1242
        %v1312 = vpop.f32.mrf.mxu0
        %v1313 = vadd.f32 0.0, %v1312
        %v1314 = vpop.f32.mrf.mxu0
        %1315 = vdwg.mxu0
        %v1316 = vsel %vm522, %v1313, -inf
        %1317 = vmax.xlane.f32.xlu0 %v1316
        %v1318 = vpop.xlane.xlu0 %1317
        %v1319 = vsub.f32 %v1313, %v1318
        %v1320 = vmul.f32 %v1319, 1.442695
        %v1321 = vpow.pop %v1320
        %v1322 = vsel %vm522, %v1321, 0.0
        %1323 = vadd.xlane.f32.xlu0 %v1322
        %v1324 = vpop.xlane.xlu0 %1323
        %v1325 = vrcp.pop %v1324
        %v1326 = vmul.f32 %v1321, %v1325
        %1327 = vrot.lane.b32.xlu0 %v515, 40
        %v1328 = vpop.permute.xlu0 %1327
        %v1331 = vsel %vm522, %v1326, 0
        %1333 = vmatprep.subr.mxu0 0.0
        %1334 = vmatpush1.msra.mxu0 0.0
        %1335 = vmatprep.subr.mxu0 0.0
        %1336 = vmatpush1.msra.mxu0 0.0
        %1337 = vmatprep.subr.mxu0 0.0
        %1338 = vmatpush1.msra.mxu0 0.0
        %1339 = vmatprep.subr.mxu0 0.0
        %1340 = vmatpush1.msra.mxu0 0.0
        %1341 = vmatprep.subr.mxu0 0.0
        %1342 = vmatpush1.msra.mxu0 0.0
        %1343 = vmatprep.subr.mxu0 0.0
        %1344 = vmatpush1.msra.mxu0 0.0
        %1345 = vmatprep.subr.mxu0 0.0
        %1346 = vmatpush1.msra.mxu0 0.0
        %1347 = vmatprep.subr.mxu0 0.0
        %1348 = vmatpush1.msra.mxu0 0.0
        %1349 = vmatprep.subr.mxu0 0.0
        %1350 = vmatpush1.msra.mxu0 0.0
        %1351 = vmatprep.subr.mxu0 0.0
        %1352 = vmatpush1.msra.mxu0 0.0
        %1353 = vmatprep.subr.mxu0 0.0
        %1354 = vmatpush1.msra.mxu0 0.0
        %1355 = vmatprep.subr.mxu0 0.0
        %1356 = vmatpush1.msra.mxu0 0.0
        %1357 = vmatprep.subr.mxu0 0.0
        %1358 = vmatpush1.msra.mxu0 0.0
        %1359 = vmatprep.subr.mxu0 0.0
        %1360 = vmatpush1.msra.mxu0 0.0
        %1361 = vmatprep.subr.mxu0 0.0
        %1362 = vmatpush1.msra.mxu0 0.0
        %1363 = vmatprep.subr.mxu0 0.0
        %1364 = vmatpush1.msra.mxu0 %v1328
        %1365 = vmatprep.subr.mxu0 0.0
        %1366 = vmatpush2.msra.mxu0 0.0
        %1367 = vmatprep.subr.mxu0 0.0
        %1368 = vmatpush2.msra.mxu0 0.0
        %1369 = vmatprep.subr.mxu0 0.0
        %1370 = vmatpush2.msra.mxu0 0.0
        %1371 = vmatprep.subr.mxu0 0.0
        %1372 = vmatpush2.msra.mxu0 0.0
        %1373 = vmatprep.subr.mxu0 0.0
        %1374 = vmatpush2.msra.mxu0 0.0
        %1375 = vmatprep.subr.mxu0 0.0
        %1376 = vmatpush2.msra.mxu0 0.0
        %1377 = vmatprep.subr.mxu0 0.0
        %1378 = vmatpush2.msra.mxu0 0.0
        %1379 = vmatprep.subr.mxu0 0.0
        %1380 = vmatpush2.msra.mxu0 0.0
        %1381 = vmatprep.subr.mxu0 0.0
        %1382 = vmatpush2.msra.mxu0 0.0
        %1383 = vmatprep.subr.mxu0 0.0
        %1384 = vmatpush2.msra.mxu0 0.0
        %1385 = vmatprep.subr.mxu0 0.0
        %1386 = vmatpush2.msra.mxu0 0.0
        %1387 = vmatprep.subr.mxu0 0.0
        %1388 = vmatpush2.msra.mxu0 0.0
        %1389 = vmatprep.subr.mxu0 0.0
        %1390 = vmatpush2.msra.mxu0 0.0
        %1391 = vmatprep.subr.mxu0 0.0
        %1392 = vmatpush2.msra.mxu0 0.0
        %1393 = vmatprep.subr.mxu0 0.0
        %1394 = vmatpush2.msra.mxu0 0.0
        %1395 = vmatprep.subr.mxu0 0.0
        %1396 = vmatpush2.msra.mxu0 0.0
        %1397 = vmatprep.mubr.f32.mxu0 0.0
        %1398 = vmatmul.mubr.f32.gmra.mxu0 %v1331
        %v1399 = vpop.f32.mrf.mxu0
        %v1400 = vadd.f32 0.0, %v1399
        %v1401 = vpop.f32.mrf.mxu0
        %1402 = vdwg.mxu0
        %v1403 = vld [vmem:[%s4 + $0x18] sm:$0xff]
        %v1405 = vsel %vm522, %v1400, 0
        %1407 = vmatprep.subr.mxu0 0.0
        %1408 = vmatpush1.msra.mxu0 0.0
        %1409 = vmatprep.subr.mxu0 0.0
        %1410 = vmatpush1.msra.mxu0 0.0
        %1411 = vmatprep.subr.mxu0 0.0
        %1412 = vmatpush1.msra.mxu0 0.0
        %1413 = vmatprep.subr.mxu0 0.0
        %1414 = vmatpush1.msra.mxu0 0.0
        %1415 = vmatprep.subr.mxu0 0.0
        %1416 = vmatpush1.msra.mxu0 0.0
        %1417 = vmatprep.subr.mxu0 0.0
        %1418 = vmatpush1.msra.mxu0 0.0
        %1419 = vmatprep.subr.mxu0 0.0
        %1420 = vmatpush1.msra.mxu0 0.0
        %1421 = vmatprep.subr.mxu0 0.0
        %1422 = vmatpush1.msra.mxu0 0.0
        %1423 = vmatprep.subr.mxu0 0.0
        %1424 = vmatpush1.msra.mxu0 0.0
        %1425 = vmatprep.subr.mxu0 0.0
        %1426 = vmatpush1.msra.mxu0 0.0
        %1427 = vmatprep.subr.mxu0 0.0
        %1428 = vmatpush1.msra.mxu0 0.0
        %1429 = vmatprep.subr.mxu0 0.0
        %1430 = vmatpush1.msra.mxu0 0.0
        %1431 = vmatprep.subr.mxu0 0.0
        %1432 = vmatpush1.msra.mxu0 0.0
        %1433 = vmatprep.subr.mxu0 0.0
        %1434 = vmatpush1.msra.mxu0 0.0
        %1435 = vmatprep.subr.mxu0 0.0
        %1436 = vmatpush1.msra.mxu0 0.0
        %1437 = vmatprep.subr.mxu0 0.0
        %1438 = vmatpush1.msra.mxu0 %v1403
        %1439 = vmatprep.subr.mxu0 0.0
        %1440 = vmatpush2.msra.mxu0 0.0
        %1441 = vmatprep.subr.mxu0 0.0
        %1442 = vmatpush2.msra.mxu0 0.0
        %1443 = vmatprep.subr.mxu0 0.0
        %1444 = vmatpush2.msra.mxu0 0.0
        %1445 = vmatprep.subr.mxu0 0.0
        %1446 = vmatpush2.msra.mxu0 0.0
        %1447 = vmatprep.subr.mxu0 0.0
        %1448 = vmatpush2.msra.mxu0 0.0
        %1449 = vmatprep.subr.mxu0 0.0
        %1450 = vmatpush2.msra.mxu0 0.0
        %1451 = vmatprep.subr.mxu0 0.0
        %1452 = vmatpush2.msra.mxu0 0.0
        %1453 = vmatprep.subr.mxu0 0.0
        %1454 = vmatpush2.msra.mxu0 0.0
        %1455 = vmatprep.subr.mxu0 0.0
        %1456 = vmatpush2.msra.mxu0 0.0
        %1457 = vmatprep.subr.mxu0 0.0
        %1458 = vmatpush2.msra.mxu0 0.0
        %1459 = vmatprep.subr.mxu0 0.0
        %1460 = vmatpush2.msra.mxu0 0.0
        %1461 = vmatprep.subr.mxu0 0.0
        %1462 = vmatpush2.msra.mxu0 0.0
        %1463 = vmatprep.subr.mxu0 0.0
        %1464 = vmatpush2.msra.mxu0 0.0
        %1465 = vmatprep.subr.mxu0 0.0
        %1466 = vmatpush2.msra.mxu0 0.0
        %1467 = vmatprep.subr.mxu0 0.0
        %1468 = vmatpush2.msra.mxu0 0.0
        %1469 = vmatprep.subr.mxu0 0.0
        %1470 = vmatpush2.msra.mxu0 0.0
        %1471 = vmatprep.mubr.f32.mxu0 0.0
        %1472 = vmatmul.mubr.f32.gmra.mxu0 %v1405
        %v1473 = vpop.f32.mrf.mxu0
        %v1474 = vadd.f32 0.0, %v1473
        %v1475 = vpop.f32.mrf.mxu0
        %1476 = vdwg.mxu0
        %v1477 = vadd.f32 %v1237, %v1474
        %v1478 = vadd.f32 %v409, %v1477
        %v1479 = vld [vmem:[%s5] sm:$0x1]
        %v1481 = vlaneseq
        %v1482 = vshrl.u32 %v1481, 7
        %v1483 = vsub.s32 0, %v1482
        %v1484 = vrot.slane %v1479, %v1483
        %v1486 = vadd.f32 %v1478, %v1484
        %v1487 = vld [vmem:[%s6] sm:$0x1]
        %v1488 = vld [vmem:[%s7] sm:$0x1]
        %v1489 = vsel %vm412, %v1486, 0.0
        %1490 = vadd.xlane.f32.xlu0 %v1489
        %v1491 = vpop.xlane.xlu0 %1490
        %v1492 = vmul.f32 %v1491, %v416
        %v1493 = vsub.f32 %v1486, %v1492
        %v1494 = vmul.f32 %v1493, %v1493
        %v1495 = vsel %vm412, %v1494, 0.0
        %1496 = vadd.xlane.f32.xlu0 %v1495
        %v1497 = vpop.xlane.xlu0 %1496
        %v1498 = vmul.f32 %v1497, %v416
        %v1499 = vadd.f32 %v1498, 1e-05
        %v1500 = vrsqrt.pop %v1499
        %v1501 = vmul.f32 %v1493, %v1500
        %v1503 = vlaneseq
        %v1504 = vshrl.u32 %v1503, 7
        %v1505 = vsub.s32 0, %v1504
        %v1506 = vrot.slane %v1487, %v1505
        %v1508 = vmul.f32 %v1501, %v1506
        %v1510 = vlaneseq
        %v1511 = vshrl.u32 %v1510, 7
        %v1512 = vsub.s32 0, %v1511
        %v1513 = vrot.slane %v1488, %v1512
        %v1515 = vadd.f32 %v1508, %v1513
        %v1516 = vld [vmem:[%s8] sm:$0xff]
        %v1517 = vld [vmem:[%s8 + $0x8] sm:$0xff]
        %v1518 = vld [vmem:[%s8 + $0x10] sm:$0xff]
        %v1519 = vld [vmem:[%s8 + $0x18] sm:$0xff]
        %v1520 = vld [vmem:[%s9] sm:$0x1]
        %v1522 = vlaneseq
        %v1523 = vshrl.u32 %v1522, 7
        %v1524 = vsub.s32 0, %v1523
        %v1525 = vrot.slane %v1520, %v1524
        %v1528 = vsel %vm412, %v1515, 0
        %1530 = vmatprep.subr.mxu0 0.0
        %1531 = vmatpush1.msra.mxu0 0.0
        %1532 = vmatprep.subr.mxu0 0.0
        %1533 = vmatpush1.msra.mxu0 0.0
        %1534 = vmatprep.subr.mxu0 0.0
        %1535 = vmatpush1.msra.mxu0 0.0
        %1536 = vmatprep.subr.mxu0 0.0
        %1537 = vmatpush1.msra.mxu0 0.0
        %1538 = vmatprep.subr.mxu0 0.0
        %1539 = vmatpush1.msra.mxu0 0.0
        %1540 = vmatprep.subr.mxu0 0.0
        %1541 = vmatpush1.msra.mxu0 0.0
        %1542 = vmatprep.subr.mxu0 0.0
        %1543 = vmatpush1.msra.mxu0 0.0
        %1544 = vmatprep.subr.mxu0 0.0
        %1545 = vmatpush1.msra.mxu0 0.0
        %1546 = vmatprep.subr.mxu0 0.0
        %1547 = vmatpush1.msra.mxu0 0.0
        %1548 = vmatprep.subr.mxu0 0.0
        %1549 = vmatpush1.msra.mxu0 0.0
        %1550 = vmatprep.subr.mxu0 0.0
        %1551 = vmatpush1.msra.mxu0 0.0
        %1552 = vmatprep.subr.mxu0 0.0
        %1553 = vmatpush1.msra.mxu0 0.0
        %1554 = vmatprep.subr.mxu0 0.0
        %1555 = vmatpush1.msra.mxu0 %v1519
        %1556 = vmatprep.subr.mxu0 0.0
        %1557 = vmatpush1.msra.mxu0 %v1518
        %1558 = vmatprep.subr.mxu0 0.0
        %1559 = vmatpush1.msra.mxu0 %v1517
        %1560 = vmatprep.subr.mxu0 0.0
        %1561 = vmatpush1.msra.mxu0 %v1516
        %1562 = vmatprep.subr.mxu0 0.0
        %1563 = vmatpush2.msra.mxu0 0.0
        %1564 = vmatprep.subr.mxu0 0.0
        %1565 = vmatpush2.msra.mxu0 0.0
        %1566 = vmatprep.subr.mxu0 0.0
        %1567 = vmatpush2.msra.mxu0 0.0
        %1568 = vmatprep.subr.mxu0 0.0
        %1569 = vmatpush2.msra.mxu0 0.0
        %1570 = vmatprep.subr.mxu0 0.0
        %1571 = vmatpush2.msra.mxu0 0.0
        %1572 = vmatprep.subr.mxu0 0.0
        %1573 = vmatpush2.msra.mxu0 0.0
        %1574 = vmatprep.subr.mxu0 0.0
        %1575 = vmatpush2.msra.mxu0 0.0
        %1576 = vmatprep.subr.mxu0 0.0
        %1577 = vmatpush2.msra.mxu0 0.0
        %1578 = vmatprep.subr.mxu0 0.0
        %1579 = vmatpush2.msra.mxu0 0.0
        %1580 = vmatprep.subr.mxu0 0.0
        %1581 = vmatpush2.msra.mxu0 0.0
        %1582 = vmatprep.subr.mxu0 0.0
        %1583 = vmatpush2.msra.mxu0 0.0
        %1584 = vmatprep.subr.mxu0 0.0
        %1585 = vmatpush2.msra.mxu0 0.0
        %1586 = vmatprep.subr.mxu0 0.0
        %1587 = vmatpush2.msra.mxu0 0.0
        %1588 = vmatprep.subr.mxu0 0.0
        %1589 = vmatpush2.msra.mxu0 0.0
        %1590 = vmatprep.subr.mxu0 0.0
        %1591 = vmatpush2.msra.mxu0 0.0
        %1592 = vmatprep.subr.mxu0 0.0
        %1593 = vmatpush2.msra.mxu0 0.0
        %1594 = vmatprep.mubr.f32.mxu0 0.0
        %1595 = vmatmul.mubr.f32.gmra.mxu0 %v1528
        %v1596 = vpop.f32.mrf.mxu0
        %v1597 = vadd.f32 %v1525, %v1596
        %v1598 = vpop.f32.mrf.mxu0
        %1599 = vdwg.mxu0
        %v1600 = vmul.f32 %v1597, 0.5
        %v1601 = vmul.f32 %v1597, 0.70710677
        %v1602 = verf.f32.pop %v1601
        %v1603 = vadd.f32 %v1602, 1.0
        %v1604 = vmul.f32 %v1600, %v1603
        %v1605 = vld [vmem:[%s10] sm:$0xff]
        %v1606 = vld [vmem:[%s10 + $0x8] sm:$0xff]
        %v1607 = vld [vmem:[%s10 + $0x10] sm:$0xff]
        %v1608 = vld [vmem:[%s10 + $0x18] sm:$0xff]
        %v1609 = vld [vmem:[%s10 + $0x20] sm:$0xff]
        %v1610 = vld [vmem:[%s10 + $0x28] sm:$0xff]
        %v1611 = vld [vmem:[%s10 + $0x30] sm:$0xff]
        %v1612 = vld [vmem:[%s10 + $0x38] sm:$0xff]
        %v1613 = vld [vmem:[%s10 + $0x40] sm:$0xff]
        %v1614 = vld [vmem:[%s10 + $0x48] sm:$0xff]
        %v1615 = vld [vmem:[%s10 + $0x50] sm:$0xff]
        %v1616 = vld [vmem:[%s10 + $0x58] sm:$0xff]
        %v1617 = vld [vmem:[%s10 + $0x60] sm:$0xff]
        %v1618 = vld [vmem:[%s10 + $0x68] sm:$0xff]
        %v1619 = vld [vmem:[%s10 + $0x70] sm:$0xff]
        %v1620 = vld [vmem:[%s10 + $0x78] sm:$0xff]
        %v1621 = vld [vmem:[%s11] sm:$0x1]
        %v1623 = vlaneseq
        %v1624 = vshrl.u32 %v1623, 7
        %v1625 = vsub.s32 0, %v1624
        %v1626 = vrot.slane %v1621, %v1625
        %1628 = vmatprep.subr.mxu0 0.0
        %1629 = vmatpush1.msra.mxu0 %v1620
        %1630 = vmatprep.subr.mxu0 0.0
        %1631 = vmatpush1.msra.mxu0 %v1619
        %1632 = vmatprep.subr.mxu0 0.0
        %1633 = vmatpush1.msra.mxu0 %v1618
        %1634 = vmatprep.subr.mxu0 0.0
        %1635 = vmatpush1.msra.mxu0 %v1617
        %1636 = vmatprep.subr.mxu0 0.0
        %1637 = vmatpush1.msra.mxu0 %v1616
        %1638 = vmatprep.subr.mxu0 0.0
        %1639 = vmatpush1.msra.mxu0 %v1615
        %1640 = vmatprep.subr.mxu0 0.0
        %1641 = vmatpush1.msra.mxu0 %v1614
        %1642 = vmatprep.subr.mxu0 0.0
        %1643 = vmatpush1.msra.mxu0 %v1613
        %1644 = vmatprep.subr.mxu0 0.0
        %1645 = vmatpush1.msra.mxu0 %v1612
        %1646 = vmatprep.subr.mxu0 0.0
        %1647 = vmatpush1.msra.mxu0 %v1611
        %1648 = vmatprep.subr.mxu0 0.0
        %1649 = vmatpush1.msra.mxu0 %v1610
        %1650 = vmatprep.subr.mxu0 0.0
        %1651 = vmatpush1.msra.mxu0 %v1609
        %1652 = vmatprep.subr.mxu0 0.0
        %1653 = vmatpush1.msra.mxu0 %v1608
        %1654 = vmatprep.subr.mxu0 0.0
        %1655 = vmatpush1.msra.mxu0 %v1607
        %1656 = vmatprep.subr.mxu0 0.0
        %1657 = vmatpush1.msra.mxu0 %v1606
        %1658 = vmatprep.subr.mxu0 0.0
        %1659 = vmatpush1.msra.mxu0 %v1605
        %1660 = vmatprep.subr.mxu0 0.0
        %1661 = vmatpush2.msra.mxu0 0.0
        %1662 = vmatprep.subr.mxu0 0.0
        %1663 = vmatpush2.msra.mxu0 0.0
        %1664 = vmatprep.subr.mxu0 0.0
        %1665 = vmatpush2.msra.mxu0 0.0
        %1666 = vmatprep.subr.mxu0 0.0
        %1667 = vmatpush2.msra.mxu0 0.0
        %1668 = vmatprep.subr.mxu0 0.0
        %1669 = vmatpush2.msra.mxu0 0.0
        %1670 = vmatprep.subr.mxu0 0.0
        %1671 = vmatpush2.msra.mxu0 0.0
        %1672 = vmatprep.subr.mxu0 0.0
        %1673 = vmatpush2.msra.mxu0 0.0
        %1674 = vmatprep.subr.mxu0 0.0
        %1675 = vmatpush2.msra.mxu0 0.0
        %1676 = vmatprep.subr.mxu0 0.0
        %1677 = vmatpush2.msra.mxu0 0.0
        %1678 = vmatprep.subr.mxu0 0.0
        %1679 = vmatpush2.msra.mxu0 0.0
        %1680 = vmatprep.subr.mxu0 0.0
        %1681 = vmatpush2.msra.mxu0 0.0
        %1682 = vmatprep.subr.mxu0 0.0
        %1683 = vmatpush2.msra.mxu0 0.0
        %1684 = vmatprep.subr.mxu0 0.0
        %1685 = vmatpush2.msra.mxu0 0.0
        %1686 = vmatprep.subr.mxu0 0.0
        %1687 = vmatpush2.msra.mxu0 0.0
        %1688 = vmatprep.subr.mxu0 0.0
        %1689 = vmatpush2.msra.mxu0 0.0
        %1690 = vmatprep.subr.mxu0 0.0
        %1691 = vmatpush2.msra.mxu0 0.0
        %1692 = vmatprep.mubr.f32.mxu0 0.0
        %1693 = vmatmul.mubr.f32.gmra.mxu0 %v1604
        %v1694 = vpop.f32.mrf.mxu0
        %v1695 = vadd.f32 %v1626, %v1694
        %v1696 = vpop.f32.mrf.mxu0
        %1697 = vdwg.mxu0
        %v1698 = vadd.f32 %v1486, %v1695
        %1699 = vst.msk [vmem:[%s404] sm:$0xff] %vm412, %v1698
        %s1700 = sand.u32 %s291, 1
        %s1701 = scalar_lea.sflag [#allocation3], %s1700
        %s1702 = sand.u32 %s291, 1
        %s1703 = smul.addr %s1702, 8
        %s1704 = scalar_lea.vmem [#allocation2], %s1703
        // Predicated region
        $region69: #{tpu_custom_call.1} parent=67 // pred_check
          %p1705 = pneg %p301
        $region70: #{tpu_custom_call.1} parent=67 // pred_check_branch
          %1707 = sbr.rel (%p1705) target = $region72
        $region71: #{tpu_custom_call.1} parent=67 // pred_region
          %s1709 = ssub.s32 128, 128
          %1710 = vsyncadd %s1701, %s1709
          %s1711 = smul.addr %s26, 128
          %s1712 = scalar_lea.hbm %s12, %s1711
          %s1714 = sshll.u32 %s1704, 4
          %s1715 = int_to_ptr.vmem [resolvable:$true] %s1714
          %1717 = dma.vmem_to_hbm [thread:$0]  %s1715, 128, %s1712, %s1701
        $region72: #{tpu_custom_call.1} parent=67 // pred_fallthru
          _
      $region68: #{tpu_custom_call.1} parent=5 // pred_fallthru
        _
      %p1718 = scmp.le.s32.totalorder 2, %s21
      // Predicated region
      $region73: #{tpu_custom_call.1} parent=5 // pred_check
        %p1719 = pneg %p1718
      $region74: #{tpu_custom_call.1} parent=5 // pred_check_branch
        %1721 = sbr.rel (%p1719) target = $region76
      $region75: #{tpu_custom_call.1} parent=5 // pred_region
        %s1722 = ssub.s32 %s21, 2
        // Predicated region
        $region77: #{tpu_custom_call.1} parent=75 // pred_check
          %p1723 = pneg %p307
        $region78: #{tpu_custom_call.1} parent=75 // pred_check_branch
          %1725 = sbr.rel (%p1723) target = $region80
        $region79: #{tpu_custom_call.1} parent=75 // pred_region
          %s1726 = sand.u32 %s292, 1
          %s1727 = scalar_lea.sflag [#allocation3], %s1726
          %s1728 = sand.u32 %s292, 1
          %s1729 = smul.addr %s1728, 8
          %s1730 = scalar_lea.vmem [#allocation2], %s1729
          %1731 = dma.done %s1727, 128
        $region80: #{tpu_custom_call.1} parent=75 // pred_fallthru
          _
      $region76: #{tpu_custom_call.1} parent=5 // pred_fallthru
        _
    $region6: #{tpu_custom_call.1} parent=1 // loop_footer
      %s25 = sadd.s32 1, %s21
    $region7: #{tpu_custom_call.1} parent=1 // loop_footer_branch
      %20 = sbr.rel target = $region3
    $region8: #{tpu_custom_call.1} parent=1 // loop_exit
      _
    %1732 = vsyncpa [#allocation3], 1
    %s1733 = scalar_lea.sflag [#allocation3], 1
    %1734 = vsyncpa %s1733, 1

</llo_original>
